<compile_context>
chip_gen: v7x
topology: tpu7x:2x2x1
jax: 0.10.0
libtpu: 0.0.40
codegen_flags: <defaults>
</compile_context>

<pallas_src>
import numpy as np

import jax
import jax.numpy as jnp
from jax.experimental import pallas as pl
from jax.experimental.pallas import tpu as pltpu


# ---------------------------------------------------------------------------
# Model hyper-parameters (a small, concrete instantiation of cfg)
# ---------------------------------------------------------------------------
FEATURE_DIM = 32          # cfg.feature_dim
HIDDEN_DIM = 32           # cfg.context_encoder.hidden_dim
NUM_LEADS = 6             # cfg.num_leads == N
CONV_LAYERS = (
    # (out_channels, kernel_size, stride, padding)
    (8, 5, 2, 2),
    (16, 5, 2, 2),
)
CLS_HIDDEN = 64           # classifier hidden width
OUT_PAD = 8               # padded logits width (full-dim block store; sliced to NUM_LEADS)
_ALIGN = 16               # batch-tile granularity (bf16 sublane packing = 16 rows)


# ---------------------------------------------------------------------------
# Parameter packing: Conv1d -> dense Toeplitz matmul matrix (padding folded in)
# ---------------------------------------------------------------------------
def _conv_out_len(t, k, s, p):
    return (t + 2 * p - k) // s + 1


def conv1d_as_matmul(w, b, t_in, stride, pad):
    """PyTorch Conv1d weight (C_out, C_in, K), bias (C_out,) ->
    M: (T_in*C_in, T_out*C_out) matrix acting on time-major / channel-minor
    flattened activations; zero padding is folded into M (out-of-range taps
    contribute nothing).  b_tiled: (1, T_out*C_out)."""
    w = np.asarray(w, np.float32)
    b = np.asarray(b, np.float32)
    c_out, c_in, k = w.shape
    t_out = _conv_out_len(t_in, k, stride, pad)
    m = np.zeros((t_in * c_in, t_out * c_out), np.float32)
    for to in range(t_out):
        for kk in range(k):
            ti = to * stride + kk - pad
            if 0 <= ti < t_in:
                # M[ti*C_in + ci, to*C_out + co] = W[co, ci, kk]
                m[ti * c_in:(ti + 1) * c_in, to * c_out:(to + 1) * c_out] = w[:, :, kk].T
    b_tiled = np.tile(b, t_out)[None, :].astype(np.float32)
    return jnp.asarray(m), jnp.asarray(b_tiled), t_out


def pack_params(p, t_signal):
    """Repack PyTorch-layout params into the matrices the kernel consumes.
    Matmul weights are stored bf16 (f32 accumulation happens in the kernel);
    biases stay f32."""
    bf16 = jnp.bfloat16
    kp = {}
    t = t_signal
    for li, (c_out, k, s, pad) in enumerate(CONV_LAYERS):
        m, bt, t = conv1d_as_matmul(p[f"w_conv{li}"], p[f"b_conv{li}"], t, s, pad)
        kp[f"m_conv{li}"] = m.astype(bf16)
        kp[f"b_conv{li}"] = bt

    # AdaptiveAvgPool1d(1) (mean over t) fused into the final Linear(c_last, D).
    w_fc = np.asarray(p["w_fc"], np.float32)                        # (c_last, D)
    kp["w_poolfc"] = jnp.asarray(np.tile(w_fc, (t, 1)) / float(t)).astype(bf16)
    kp["b_fc"] = jnp.asarray(p["b_fc"], jnp.float32)[None, :]

    # phi layer 1 and classifier branch-a share LHS `feat`: fuse along lanes.
    w_p1 = np.asarray(p["w_p1"], np.float32)                        # (D, H)
    w_c1 = np.asarray(p["w_c1"], np.float32)                        # (2D, CLS_HIDDEN)
    kp["w_p1c1a"] = jnp.asarray(
        np.concatenate([w_p1, w_c1[:FEATURE_DIM]], axis=1)).astype(bf16)   # (D, H+CLS_HIDDEN)
    kp["b_p1"] = jnp.asarray(p["b_p1"], jnp.float32)[None, :]
    kp["w_c1b"] = jnp.asarray(w_c1[FEATURE_DIM:]).astype(bf16)      # (D, CLS_HIDDEN)
    kp["b_c1"] = jnp.asarray(p["b_c1"], jnp.float32)[None, :]

    for name in ("p2", "r1", "r2", "c2"):
        kp[f"w_{name}"] = jnp.asarray(p[f"w_{name}"], jnp.float32).astype(bf16)
        kp[f"b_{name}"] = jnp.asarray(p[f"b_{name}"], jnp.float32)[None, :]

    # Final projection padded to OUT_PAD lanes (padded lanes -> zero logits,
    # sliced off outside the kernel).
    w_c3 = np.zeros((CLS_HIDDEN, OUT_PAD), np.float32)
    w_c3[:, :NUM_LEADS] = np.asarray(p["w_c3"], np.float32)
    b_c3 = np.zeros((1, OUT_PAD), np.float32)
    b_c3[0, :NUM_LEADS] = np.asarray(p["b_c3"], np.float32)
    kp["w_c3"] = jnp.asarray(w_c3).astype(bf16)
    kp["b_c3"] = jnp.asarray(b_c3)
    return kp


_WEIGHT_ORDER = (
    "m_conv0", "b_conv0", "m_conv1", "b_conv1", "w_poolfc", "b_fc",
    "w_p1c1a", "b_p1", "w_p2", "b_p2", "w_r1", "b_r1", "w_r2", "b_r2",
    "w_c1b", "b_c1", "w_c2", "b_c2", "w_c3", "b_c3",
)


# ---------------------------------------------------------------------------
# Fully fused SigLab kernel (one lead-major batch-tile per grid step)
# ---------------------------------------------------------------------------
def _siglab_kernel(
    x_ref,
    m1_ref, bc0_ref, m2_ref, bc1_ref, wpf_ref, bfc_ref,
    wpc_ref, bp1_ref, wp2_ref, bp2_ref,
    wr1_ref, br1_ref, wr2_ref, br2_ref,
    wc1b_ref, bcl1_ref, wc2_ref, bcl2_ref, wc3_ref, bcl3_ref,
    out_ref,
):
    n, tb, t = x_ref.shape                 # (NUM_LEADS, tile_b, T) -- static
    rows = n * tb
    bf16 = jnp.bfloat16

    def dot(a, w_ref):                      # bf16 x bf16 -> f32 accumulation
        return jnp.dot(a, w_ref[...], preferred_element_type=jnp.float32)

    relu = lambda v: jnp.maximum(v, 0.0)

    # --- LocalEncoder: convs as constant Toeplitz matmuls, pool+fc fused ------
    x = x_ref[...].reshape(rows, t)                             # bf16, lead-major rows
    h = relu(dot(x, m1_ref) + bc0_ref[...])                     # (rows, T1*C1) f32
    h = relu(dot(h.astype(bf16), m2_ref) + bc1_ref[...])        # (rows, T2*C2)
    feat = relu(dot(h.astype(bf16), wpf_ref) + bfc_ref[...])    # (rows, D)
    feat_bf = feat.astype(bf16)

    # --- phi layer 1 + classifier branch-a: one fused matmul over `feat` ------
    fp = dot(feat_bf, wpc_ref)                                  # (rows, H + CLS_HIDDEN)
    g = relu(fp[:, :HIDDEN_DIM] + bp1_ref[...])                 # (rows, H)
    feat_c1 = fp[:, HIDDEN_DIM:]                                # (rows, CLS_HIDDEN) pre-bias

    g = relu(dot(g.astype(bf16), wp2_ref) + bp2_ref[...])       # (rows, H)

    # --- DeepSets lead-sum: lead-major rows -> static sublane-aligned adds ----
    pooled = g[0:tb]
    for lead in range(1, n):
        pooled = pooled + g[lead * tb:(lead + 1) * tb]          # (tile_b, H)

    c = relu(dot(pooled.astype(bf16), wr1_ref) + br1_ref[...])
    c = relu(dot(c.astype(bf16), wr2_ref) + br2_ref[...])       # (tile_b, D)

    # --- classifier context branch at (tile_b, .), then broadcast to leads ----
    ctx_c1 = dot(c.astype(bf16), wc1b_ref)                      # (tile_b, CLS_HIDDEN)
    ctx_rows = jnp.broadcast_to(
        ctx_c1[None], (n, tb, CLS_HIDDEN)).reshape(rows, CLS_HIDDEN)

    y = relu(feat_c1 + ctx_rows + bcl1_ref[...])
    y = relu(dot(y.astype(bf16), wc2_ref) + bcl2_ref[...])
    out = dot(y.astype(bf16), wc3_ref) + bcl3_ref[...]          # (rows, OUT_PAD) f32
    out_ref[...] = out.reshape(n, tb, OUT_PAD)


# ---------------------------------------------------------------------------
# Tiling / VMEM budget (per-generation)
# ---------------------------------------------------------------------------
def _tpu_budget():
    """Returns (max batch tile, vmem_limit_bytes) from the chip's VMEM size."""
    vmem = None
    try:
        vmem = getattr(pltpu.get_tpu_info(), "vmem_capacity_bytes", None)
    except Exception:
        vmem = None
    if vmem is not None and vmem >= 96 * 1024 * 1024:
        return 512, 100 * 1024 * 1024        # v5e / v6e: 128 MiB physical VMEM
    return 256, 48 * 1024 * 1024             # v7x (64 MiB) / unknown: conservative


def _round_up(x, m):
    return (x + m - 1) // m * m


def _choose_tiling(b, max_tile):
    """Pick (tile_b, padded_B).  tile_b is a multiple of _ALIGN, padded_B a
    multiple of tile_b (padded batch rows compute garbage that is sliced off),
    and the grid has >= 2 steps whenever the batch allows (v7x has 2 TCs)."""
    b_al = _round_up(max(b, 1), _ALIGN)
    n_tiles = max(1, pl.cdiv(b_al, max_tile))
    if n_tiles == 1 and b_al >= 2 * _ALIGN:
        n_tiles = 2
    tile = _round_up(pl.cdiv(b_al, n_tiles), _ALIGN)
    return tile, tile * n_tiles


# ---------------------------------------------------------------------------
# Wrapper
# ---------------------------------------------------------------------------
def siglab_forward(signals, kparams):
    """signals: (B, N, T) float32 -> lead_logits: (B, N, NUM_LEADS)."""
    B, N, T = signals.shape
    assert N == NUM_LEADS

    max_tile, vmem_limit = _tpu_budget()
    tile_b, b_pad = _choose_tiling(B, max_tile)
    grid = (b_pad // tile_b,)

    # Lead-major layout (N, B_pad, T); cast to bf16 once here (fuses with the
    # transpose/pad in XLA and halves the kernel-side x DMA + VMEM block).
    x = jnp.transpose(signals, (1, 0, 2)).astype(jnp.bfloat16)
    if b_pad != B:
        x = jnp.pad(x, ((0, 0), (0, b_pad - B), (0, 0)))

    weights = [kparams[name] for name in _WEIGHT_ORDER]

    def const_spec(shape):
        nd = len(shape)
        return pl.BlockSpec(shape, lambda i: (0,) * nd)

    in_specs = ([pl.BlockSpec((NUM_LEADS, tile_b, T), lambda i: (0, i, 0))]
                + [const_spec(w.shape) for w in weights])
    out_spec = pl.BlockSpec((NUM_LEADS, tile_b, OUT_PAD), lambda i: (0, i, 0))

    out = pl.pallas_call(
        _siglab_kernel,
        out_shape=jax.ShapeDtypeStruct((NUM_LEADS, b_pad, OUT_PAD), jnp.float32),
        grid=grid,
        in_specs=in_specs,
        out_specs=out_spec,
        compiler_params=pltpu.CompilerParams(
            dimension_semantics=("parallel",),
            vmem_limit_bytes=vmem_limit,
        ),
    )(x, *weights)

    # (N, B_pad, OUT_PAD) -> (B, N, NUM_LEADS); only OUT_PAD=8 lanes per row were
    # written, so this slice touches 16x fewer bytes than a 128-lane padding.
    return jnp.transpose(out[:, :B, :NUM_LEADS], (1, 0, 2))


# ---------------------------------------------------------------------------
# Pure-JAX reference (independent math: real conv, mean-pool, concat)
# ---------------------------------------------------------------------------
def siglab_forward_ref(signals, p):
    B, N, T = signals.shape
    x = signals.reshape(B * N, 1, T)
    for li, (c_out, k, s, pad) in enumerate(CONV_LAYERS):
        x = jax.lax.conv_general_dilated(
            x, p[f"w_conv{li}"], window_strides=(s,), padding=[(pad, pad)],
            dimension_numbers=("NCH", "OIH", "NCH"))
        x = jnp.maximum(x + p[f"b_conv{li}"][None, :, None], 0.0)
    pooled = x.mean(axis=-1)                                        # (BN, C)
    feat = jnp.maximum(pooled @ p["w_fc"] + p["b_fc"], 0.0)         # (BN, D)

    g = jnp.maximum(feat @ p["w_p1"] + p["b_p1"], 0.0)
    g = jnp.maximum(g @ p["w_p2"] + p["b_p2"], 0.0)
    pooled_leads = g.reshape(B, N, -1).sum(axis=1)
    c = jnp.maximum(pooled_leads @ p["w_r1"] + p["b_r1"], 0.0)
    c = jnp.maximum(c @ p["w_r2"] + p["b_r2"], 0.0)                 # (B, D)
    ctx = jnp.broadcast_to(c[:, None, :], (B, N, c.shape[-1])).reshape(B * N, -1)
    z = jnp.concatenate([feat, ctx], axis=-1)
    y = jnp.maximum(z @ p["w_c1"] + p["b_c1"], 0.0)
    y = jnp.maximum(y @ p["w_c2"] + p["b_c2"], 0.0)
    y = y @ p["w_c3"] + p["b_c3"]
    return y.reshape(B, N, -1)


# ---------------------------------------------------------------------------
# Deterministic parameter init (PyTorch-style uniform(-1/sqrt(fan_in), ...))
# ---------------------------------------------------------------------------
def init_params(key):
    p = {}

    def uni(k, shape, fan_in):
        lim = 1.0 / np.sqrt(fan_in)
        return jax.random.uniform(k, shape, jnp.float32, -lim, lim)

    keys = iter(jax.random.split(key, 32))

    c_in = 1
    for li, (c_out, k, s, pad) in enumerate(CONV_LAYERS):
        fan = c_in * k
        p[f"w_conv{li}"] = uni(next(keys), (c_out, c_in, k), fan)   # PyTorch layout
        p[f"b_conv{li}"] = uni(next(keys), (c_out,), fan)
        c_in = c_out
    p["w_fc"] = uni(next(keys), (c_in, FEATURE_DIM), c_in)
    p["b_fc"] = uni(next(keys), (FEATURE_DIM,), c_in)

    p["w_p1"] = uni(next(keys), (FEATURE_DIM, HIDDEN_DIM), FEATURE_DIM)
    p["b_p1"] = uni(next(keys), (HIDDEN_DIM,), FEATURE_DIM)
    p["w_p2"] = uni(next(keys), (HIDDEN_DIM, HIDDEN_DIM), HIDDEN_DIM)
    p["b_p2"] = uni(next(keys), (HIDDEN_DIM,), HIDDEN_DIM)
    p["w_r1"] = uni(next(keys), (HIDDEN_DIM, HIDDEN_DIM), HIDDEN_DIM)
    p["b_r1"] = uni(next(keys), (HIDDEN_DIM,), HIDDEN_DIM)
    p["w_r2"] = uni(next(keys), (HIDDEN_DIM, FEATURE_DIM), HIDDEN_DIM)
    p["b_r2"] = uni(next(keys), (FEATURE_DIM,), HIDDEN_DIM)

    p["w_c1"] = uni(next(keys), (2 * FEATURE_DIM, CLS_HIDDEN), 2 * FEATURE_DIM)
    p["b_c1"] = uni(next(keys), (CLS_HIDDEN,), 2 * FEATURE_DIM)
    p["w_c2"] = uni(next(keys), (CLS_HIDDEN, CLS_HIDDEN), CLS_HIDDEN)
    p["b_c2"] = uni(next(keys), (CLS_HIDDEN,), CLS_HIDDEN)
    p["w_c3"] = uni(next(keys), (CLS_HIDDEN, NUM_LEADS), CLS_HIDDEN)
    p["b_c3"] = uni(next(keys), (NUM_LEADS,), CLS_HIDDEN)
    return p


# ---------------------------------------------------------------------------
if __name__ == "__main__":
    B, N, T = 2, NUM_LEADS, 64

    root = jax.random.PRNGKey(0)
    kparam, ksig = jax.random.split(root)
    params = init_params(kparam)
    signals = jax.random.normal(ksig, (B, N, T), dtype=jnp.float32)

    kparams = pack_params(params, T)

    fwd = jax.jit(lambda s: siglab_forward(s, kparams))
    logits = jax.block_until_ready(fwd(signals))
    assert logits.shape == (B, N, NUM_LEADS), logits.shape

    ref = siglab_forward_ref(signals, params)
    # Tolerance accounts for bf16 matmul inputs (f32 accumulation) in the kernel.
    np.testing.assert_allclose(np.asarray(logits), np.asarray(ref),
                               rtol=5e-2, atol=5e-2)

    # NOTE: predict / predict_leads (Hungarian matching) are host-side
    # post-processing in the original module and intentionally not a kernel.
    print("KERNEL_OK")
</pallas_src>

<mosaic_0001>
module attributes {stable_mosaic.version = 11 : i64} {
  func.func @_siglab_kernel(%arg0: i32, %arg1: memref<6x16x64xbf16, #tpu.memory_space<vmem>>, %arg2: memref<64x256xbf16, #tpu.memory_space<vmem>>, %arg3: memref<1x256xf32, #tpu.memory_space<vmem>>, %arg4: memref<256x256xbf16, #tpu.memory_space<vmem>>, %arg5: memref<1x256xf32, #tpu.memory_space<vmem>>, %arg6: memref<256x32xbf16, #tpu.memory_space<vmem>>, %arg7: memref<1x32xf32, #tpu.memory_space<vmem>>, %arg8: memref<32x96xbf16, #tpu.memory_space<vmem>>, %arg9: memref<1x32xf32, #tpu.memory_space<vmem>>, %arg10: memref<32x32xbf16, #tpu.memory_space<vmem>>, %arg11: memref<1x32xf32, #tpu.memory_space<vmem>>, %arg12: memref<32x32xbf16, #tpu.memory_space<vmem>>, %arg13: memref<1x32xf32, #tpu.memory_space<vmem>>, %arg14: memref<32x32xbf16, #tpu.memory_space<vmem>>, %arg15: memref<1x32xf32, #tpu.memory_space<vmem>>, %arg16: memref<32x64xbf16, #tpu.memory_space<vmem>>, %arg17: memref<1x64xf32, #tpu.memory_space<vmem>>, %arg18: memref<64x64xbf16, #tpu.memory_space<vmem>>, %arg19: memref<1x64xf32, #tpu.memory_space<vmem>>, %arg20: memref<64x8xbf16, #tpu.memory_space<vmem>>, %arg21: memref<1x8xf32, #tpu.memory_space<vmem>>, %arg22: memref<6x16x8xf32, #tpu.memory_space<vmem>>) attributes {dimension_semantics = [#tpu.dimension_semantics<parallel>], iteration_bounds = array<i64: 1>, scalar_prefetch = 0 : i64, scratch_operands = 0 : i64, tpu.core_type = #tpu.core_type<tc>, window_params = [{transform_indices = @transform_0, window_bounds = array<i64: 6, 16, 64>}, {pipeline_mode = #tpu.pipeline_mode<synchronous>, transform_indices = @transform_1, window_bounds = array<i64: 64, 256>}, {pipeline_mode = #tpu.pipeline_mode<synchronous>, transform_indices = @transform_2, window_bounds = array<i64: 1, 256>}, {pipeline_mode = #tpu.pipeline_mode<synchronous>, transform_indices = @transform_3, window_bounds = array<i64: 256, 256>}, {pipeline_mode = #tpu.pipeline_mode<synchronous>, transform_indices = @transform_4, window_bounds = array<i64: 1, 256>}, {pipeline_mode = #tpu.pipeline_mode<synchronous>, transform_indices = @transform_5, window_bounds = array<i64: 256, 32>}, {pipeline_mode = #tpu.pipeline_mode<synchronous>, transform_indices = @transform_6, window_bounds = array<i64: 1, 32>}, {pipeline_mode = #tpu.pipeline_mode<synchronous>, transform_indices = @transform_7, window_bounds = array<i64: 32, 96>}, {pipeline_mode = #tpu.pipeline_mode<synchronous>, transform_indices = @transform_8, window_bounds = array<i64: 1, 32>}, {pipeline_mode = #tpu.pipeline_mode<synchronous>, transform_indices = @transform_9, window_bounds = array<i64: 32, 32>}, {pipeline_mode = #tpu.pipeline_mode<synchronous>, transform_indices = @transform_10, window_bounds = array<i64: 1, 32>}, {pipeline_mode = #tpu.pipeline_mode<synchronous>, transform_indices = @transform_11, window_bounds = array<i64: 32, 32>}, {pipeline_mode = #tpu.pipeline_mode<synchronous>, transform_indices = @transform_12, window_bounds = array<i64: 1, 32>}, {pipeline_mode = #tpu.pipeline_mode<synchronous>, transform_indices = @transform_13, window_bounds = array<i64: 32, 32>}, {pipeline_mode = #tpu.pipeline_mode<synchronous>, transform_indices = @transform_14, window_bounds = array<i64: 1, 32>}, {pipeline_mode = #tpu.pipeline_mode<synchronous>, transform_indices = @transform_15, window_bounds = array<i64: 32, 64>}, {pipeline_mode = #tpu.pipeline_mode<synchronous>, transform_indices = @transform_16, window_bounds = array<i64: 1, 64>}, {pipeline_mode = #tpu.pipeline_mode<synchronous>, transform_indices = @transform_17, window_bounds = array<i64: 64, 64>}, {pipeline_mode = #tpu.pipeline_mode<synchronous>, transform_indices = @transform_18, window_bounds = array<i64: 1, 64>}, {pipeline_mode = #tpu.pipeline_mode<synchronous>, transform_indices = @transform_19, window_bounds = array<i64: 64, 8>}, {pipeline_mode = #tpu.pipeline_mode<synchronous>, transform_indices = @transform_20, window_bounds = array<i64: 1, 8>}, {transform_indices = @transform_21, window_bounds = array<i64: 6, 16, 8>}]} {
    %c0 = arith.constant 0 : index
    %c0_0 = arith.constant 0 : index
    %c0_1 = arith.constant 0 : index
    %0 = vector.load %arg1[%c0, %c0_0, %c0_1] : memref<6x16x64xbf16, #tpu.memory_space<vmem>>, vector<6x16x64xbf16>
    %1 = vector.shape_cast %0 : vector<6x16x64xbf16> to vector<96x64xbf16>
    %c0_2 = arith.constant 0 : index
    %c0_3 = arith.constant 0 : index
    %2 = vector.load %arg2[%c0_2, %c0_3] : memref<64x256xbf16, #tpu.memory_space<vmem>>, vector<64x256xbf16>
    %cst = arith.constant dense<0.000000e+00> : vector<96x256xf32>
    %3 = tpu.matmul %1, %2, %cst {dimension_numbers = #tpu.dot_dimension_numbers<[1], [0], [0], [1], [0, 0, 1, 1], [], []>} : vector<96x64xbf16>, vector<64x256xbf16>, vector<96x256xf32> -> vector<96x256xf32>
    %c0_4 = arith.constant 0 : index
    %c0_5 = arith.constant 0 : index
    %4 = vector.load %arg3[%c0_4, %c0_5] : memref<1x256xf32, #tpu.memory_space<vmem>>, vector<1x256xf32>
    %5 = vector.broadcast %4 : vector<1x256xf32> to vector<96x256xf32>
    %6 = arith.addf %3, %5 : vector<96x256xf32>
    %cst_6 = arith.constant 0.000000e+00 : f32
    %7 = vector.broadcast %cst_6 : f32 to vector<96x256xf32>
    %8 = arith.maximumf %6, %7 : vector<96x256xf32>
    %9 = arith.truncf %8 : vector<96x256xf32> to vector<96x256xbf16>
    %c0_7 = arith.constant 0 : index
    %c0_8 = arith.constant 0 : index
    %10 = vector.load %arg4[%c0_7, %c0_8] : memref<256x256xbf16, #tpu.memory_space<vmem>>, vector<256x256xbf16>
    %cst_9 = arith.constant dense<0.000000e+00> : vector<96x256xf32>
    %11 = tpu.matmul %9, %10, %cst_9 {dimension_numbers = #tpu.dot_dimension_numbers<[1], [0], [0], [1], [0, 0, 1, 1], [], []>} : vector<96x256xbf16>, vector<256x256xbf16>, vector<96x256xf32> -> vector<96x256xf32>
    %c0_10 = arith.constant 0 : index
    %c0_11 = arith.constant 0 : index
    %12 = vector.load %arg5[%c0_10, %c0_11] : memref<1x256xf32, #tpu.memory_space<vmem>>, vector<1x256xf32>
    %13 = vector.broadcast %12 : vector<1x256xf32> to vector<96x256xf32>
    %14 = arith.addf %11, %13 : vector<96x256xf32>
    %cst_12 = arith.constant 0.000000e+00 : f32
    %15 = vector.broadcast %cst_12 : f32 to vector<96x256xf32>
    %16 = arith.maximumf %14, %15 : vector<96x256xf32>
    %17 = arith.truncf %16 : vector<96x256xf32> to vector<96x256xbf16>
    %c0_13 = arith.constant 0 : index
    %c0_14 = arith.constant 0 : index
    %18 = vector.load %arg6[%c0_13, %c0_14] : memref<256x32xbf16, #tpu.memory_space<vmem>>, vector<256x32xbf16>
    %cst_15 = arith.constant dense<0.000000e+00> : vector<96x32xf32>
    %19 = tpu.matmul %17, %18, %cst_15 {dimension_numbers = #tpu.dot_dimension_numbers<[1], [0], [0], [1], [0, 0, 1, 1], [], []>} : vector<96x256xbf16>, vector<256x32xbf16>, vector<96x32xf32> -> vector<96x32xf32>
    %c0_16 = arith.constant 0 : index
    %c0_17 = arith.constant 0 : index
    %20 = vector.load %arg7[%c0_16, %c0_17] : memref<1x32xf32, #tpu.memory_space<vmem>>, vector<1x32xf32>
    %21 = vector.broadcast %20 : vector<1x32xf32> to vector<96x32xf32>
    %22 = arith.addf %19, %21 : vector<96x32xf32>
    %cst_18 = arith.constant 0.000000e+00 : f32
    %23 = vector.broadcast %cst_18 : f32 to vector<96x32xf32>
    %24 = arith.maximumf %22, %23 : vector<96x32xf32>
    %25 = arith.truncf %24 : vector<96x32xf32> to vector<96x32xbf16>
    %c0_19 = arith.constant 0 : index
    %c0_20 = arith.constant 0 : index
    %26 = vector.load %arg8[%c0_19, %c0_20] : memref<32x96xbf16, #tpu.memory_space<vmem>>, vector<32x96xbf16>
    %cst_21 = arith.constant dense<0.000000e+00> : vector<96x96xf32>
    %27 = tpu.matmul %25, %26, %cst_21 {dimension_numbers = #tpu.dot_dimension_numbers<[1], [0], [0], [1], [0, 0, 1, 1], [], []>} : vector<96x32xbf16>, vector<32x96xbf16>, vector<96x96xf32> -> vector<96x96xf32>
    %28 = vector.extract_strided_slice %27 {offsets = [0, 0], sizes = [96, 32], strides = [1, 1]} : vector<96x96xf32> to vector<96x32xf32>
    %c0_22 = arith.constant 0 : index
    %c0_23 = arith.constant 0 : index
    %29 = vector.load %arg9[%c0_22, %c0_23] : memref<1x32xf32, #tpu.memory_space<vmem>>, vector<1x32xf32>
    %30 = vector.broadcast %29 : vector<1x32xf32> to vector<96x32xf32>
    %31 = arith.addf %28, %30 : vector<96x32xf32>
    %cst_24 = arith.constant 0.000000e+00 : f32
    %32 = vector.broadcast %cst_24 : f32 to vector<96x32xf32>
    %33 = arith.maximumf %31, %32 : vector<96x32xf32>
    %34 = vector.extract_strided_slice %27 {offsets = [0, 32], sizes = [96, 64], strides = [1, 1]} : vector<96x96xf32> to vector<96x64xf32>
    %35 = arith.truncf %33 : vector<96x32xf32> to vector<96x32xbf16>
    %c0_25 = arith.constant 0 : index
    %c0_26 = arith.constant 0 : index
    %36 = vector.load %arg10[%c0_25, %c0_26] : memref<32x32xbf16, #tpu.memory_space<vmem>>, vector<32x32xbf16>
    %cst_27 = arith.constant dense<0.000000e+00> : vector<96x32xf32>
    %37 = tpu.matmul %35, %36, %cst_27 {dimension_numbers = #tpu.dot_dimension_numbers<[1], [0], [0], [1], [0, 0, 1, 1], [], []>} : vector<96x32xbf16>, vector<32x32xbf16>, vector<96x32xf32> -> vector<96x32xf32>
    %c0_28 = arith.constant 0 : index
    %c0_29 = arith.constant 0 : index
    %38 = vector.load %arg11[%c0_28, %c0_29] : memref<1x32xf32, #tpu.memory_space<vmem>>, vector<1x32xf32>
    %39 = vector.broadcast %38 : vector<1x32xf32> to vector<96x32xf32>
    %40 = arith.addf %37, %39 : vector<96x32xf32>
    %cst_30 = arith.constant 0.000000e+00 : f32
    %41 = vector.broadcast %cst_30 : f32 to vector<96x32xf32>
    %42 = arith.maximumf %40, %41 : vector<96x32xf32>
    %43 = vector.extract_strided_slice %42 {offsets = [0, 0], sizes = [16, 32], strides = [1, 1]} : vector<96x32xf32> to vector<16x32xf32>
    %44 = vector.extract_strided_slice %42 {offsets = [16, 0], sizes = [16, 32], strides = [1, 1]} : vector<96x32xf32> to vector<16x32xf32>
    %45 = arith.addf %43, %44 : vector<16x32xf32>
    %46 = vector.extract_strided_slice %42 {offsets = [32, 0], sizes = [16, 32], strides = [1, 1]} : vector<96x32xf32> to vector<16x32xf32>
    %47 = arith.addf %45, %46 : vector<16x32xf32>
    %48 = vector.extract_strided_slice %42 {offsets = [48, 0], sizes = [16, 32], strides = [1, 1]} : vector<96x32xf32> to vector<16x32xf32>
    %49 = arith.addf %47, %48 : vector<16x32xf32>
    %50 = vector.extract_strided_slice %42 {offsets = [64, 0], sizes = [16, 32], strides = [1, 1]} : vector<96x32xf32> to vector<16x32xf32>
    %51 = arith.addf %49, %50 : vector<16x32xf32>
    %52 = vector.extract_strided_slice %42 {offsets = [80, 0], sizes = [16, 32], strides = [1, 1]} : vector<96x32xf32> to vector<16x32xf32>
    %53 = arith.addf %51, %52 : vector<16x32xf32>
    %54 = arith.truncf %53 : vector<16x32xf32> to vector<16x32xbf16>
    %c0_31 = arith.constant 0 : index
    %c0_32 = arith.constant 0 : index
    %55 = vector.load %arg12[%c0_31, %c0_32] : memref<32x32xbf16, #tpu.memory_space<vmem>>, vector<32x32xbf16>
    %cst_33 = arith.constant dense<0.000000e+00> : vector<16x32xf32>
    %56 = tpu.matmul %54, %55, %cst_33 {dimension_numbers = #tpu.dot_dimension_numbers<[1], [0], [0], [1], [0, 0, 1, 1], [], []>} : vector<16x32xbf16>, vector<32x32xbf16>, vector<16x32xf32> -> vector<16x32xf32>
    %c0_34 = arith.constant 0 : index
    %c0_35 = arith.constant 0 : index
    %57 = vector.load %arg13[%c0_34, %c0_35] : memref<1x32xf32, #tpu.memory_space<vmem>>, vector<1x32xf32>
    %58 = vector.broadcast %57 : vector<1x32xf32> to vector<16x32xf32>
    %59 = arith.addf %56, %58 : vector<16x32xf32>
    %cst_36 = arith.constant 0.000000e+00 : f32
    %60 = vector.broadcast %cst_36 : f32 to vector<16x32xf32>
    %61 = arith.maximumf %59, %60 : vector<16x32xf32>
    %62 = arith.truncf %61 : vector<16x32xf32> to vector<16x32xbf16>
    %c0_37 = arith.constant 0 : index
    %c0_38 = arith.constant 0 : index
    %63 = vector.load %arg14[%c0_37, %c0_38] : memref<32x32xbf16, #tpu.memory_space<vmem>>, vector<32x32xbf16>
    %cst_39 = arith.constant dense<0.000000e+00> : vector<16x32xf32>
    %64 = tpu.matmul %62, %63, %cst_39 {dimension_numbers = #tpu.dot_dimension_numbers<[1], [0], [0], [1], [0, 0, 1, 1], [], []>} : vector<16x32xbf16>, vector<32x32xbf16>, vector<16x32xf32> -> vector<16x32xf32>
    %c0_40 = arith.constant 0 : index
    %c0_41 = arith.constant 0 : index
    %65 = vector.load %arg15[%c0_40, %c0_41] : memref<1x32xf32, #tpu.memory_space<vmem>>, vector<1x32xf32>
    %66 = vector.broadcast %65 : vector<1x32xf32> to vector<16x32xf32>
    %67 = arith.addf %64, %66 : vector<16x32xf32>
    %cst_42 = arith.constant 0.000000e+00 : f32
    %68 = vector.broadcast %cst_42 : f32 to vector<16x32xf32>
    %69 = arith.maximumf %67, %68 : vector<16x32xf32>
    %70 = arith.truncf %69 : vector<16x32xf32> to vector<16x32xbf16>
    %c0_43 = arith.constant 0 : index
    %c0_44 = arith.constant 0 : index
    %71 = vector.load %arg16[%c0_43, %c0_44] : memref<32x64xbf16, #tpu.memory_space<vmem>>, vector<32x64xbf16>
    %cst_45 = arith.constant dense<0.000000e+00> : vector<16x64xf32>
    %72 = tpu.matmul %70, %71, %cst_45 {dimension_numbers = #tpu.dot_dimension_numbers<[1], [0], [0], [1], [0, 0, 1, 1], [], []>} : vector<16x32xbf16>, vector<32x64xbf16>, vector<16x64xf32> -> vector<16x64xf32>
    %73 = vector.shape_cast %72 : vector<16x64xf32> to vector<1x16x64xf32>
    %74 = vector.shape_cast %73 : vector<1x16x64xf32> to vector<1x16x64xf32>
    %75 = vector.broadcast %74 : vector<1x16x64xf32> to vector<6x16x64xf32>
    %76 = vector.shape_cast %75 : vector<6x16x64xf32> to vector<96x64xf32>
    %77 = arith.addf %34, %76 : vector<96x64xf32>
    %c0_46 = arith.constant 0 : index
    %c0_47 = arith.constant 0 : index
    %78 = vector.load %arg17[%c0_46, %c0_47] : memref<1x64xf32, #tpu.memory_space<vmem>>, vector<1x64xf32>
    %79 = vector.broadcast %78 : vector<1x64xf32> to vector<96x64xf32>
    %80 = arith.addf %77, %79 : vector<96x64xf32>
    %cst_48 = arith.constant 0.000000e+00 : f32
    %81 = vector.broadcast %cst_48 : f32 to vector<96x64xf32>
    %82 = arith.maximumf %80, %81 : vector<96x64xf32>
    %83 = arith.truncf %82 : vector<96x64xf32> to vector<96x64xbf16>
    %c0_49 = arith.constant 0 : index
    %c0_50 = arith.constant 0 : index
    %84 = vector.load %arg18[%c0_49, %c0_50] : memref<64x64xbf16, #tpu.memory_space<vmem>>, vector<64x64xbf16>
    %cst_51 = arith.constant dense<0.000000e+00> : vector<96x64xf32>
    %85 = tpu.matmul %83, %84, %cst_51 {dimension_numbers = #tpu.dot_dimension_numbers<[1], [0], [0], [1], [0, 0, 1, 1], [], []>} : vector<96x64xbf16>, vector<64x64xbf16>, vector<96x64xf32> -> vector<96x64xf32>
    %c0_52 = arith.constant 0 : index
    %c0_53 = arith.constant 0 : index
    %86 = vector.load %arg19[%c0_52, %c0_53] : memref<1x64xf32, #tpu.memory_space<vmem>>, vector<1x64xf32>
    %87 = vector.broadcast %86 : vector<1x64xf32> to vector<96x64xf32>
    %88 = arith.addf %85, %87 : vector<96x64xf32>
    %cst_54 = arith.constant 0.000000e+00 : f32
    %89 = vector.broadcast %cst_54 : f32 to vector<96x64xf32>
    %90 = arith.maximumf %88, %89 : vector<96x64xf32>
    %91 = arith.truncf %90 : vector<96x64xf32> to vector<96x64xbf16>
    %c0_55 = arith.constant 0 : index
    %c0_56 = arith.constant 0 : index
    %92 = vector.load %arg20[%c0_55, %c0_56] : memref<64x8xbf16, #tpu.memory_space<vmem>>, vector<64x8xbf16>
    %cst_57 = arith.constant dense<0.000000e+00> : vector<96x8xf32>
    %93 = tpu.matmul %91, %92, %cst_57 {dimension_numbers = #tpu.dot_dimension_numbers<[1], [0], [0], [1], [0, 0, 1, 1], [], []>} : vector<96x64xbf16>, vector<64x8xbf16>, vector<96x8xf32> -> vector<96x8xf32>
    %c0_58 = arith.constant 0 : index
    %c0_59 = arith.constant 0 : index
    %94 = vector.load %arg21[%c0_58, %c0_59] : memref<1x8xf32, #tpu.memory_space<vmem>>, vector<1x8xf32>
    %95 = vector.broadcast %94 : vector<1x8xf32> to vector<96x8xf32>
    %96 = arith.addf %93, %95 : vector<96x8xf32>
    %97 = vector.shape_cast %96 : vector<96x8xf32> to vector<6x16x8xf32>
    %c0_60 = arith.constant 0 : index
    %c0_61 = arith.constant 0 : index
    %c0_62 = arith.constant 0 : index
    %98 = vector.load %arg22[%c0_60, %c0_61, %c0_62] : memref<6x16x8xf32, #tpu.memory_space<vmem>>, vector<6x16x8xf32>
    tpu.vector_store %arg22[%c0_60, %c0_61, %c0_62], %97 {strides = array<i32>} : memref<6x16x8xf32, #tpu.memory_space<vmem>>, vector<6x16x8xf32>,
    return
  }
  func.func @transform_0(%arg0: i32) -> (i32, i32, i32) {
    %c0_i32 = arith.constant 0 : i32
    %c0_i32_0 = arith.constant 0 : i32
    %c0_i32_1 = arith.constant 0 : i32
    return %c0_i32, %arg0, %c0_i32_0 : i32, i32, i32
  }
  func.func @transform_1(%arg0: i32) -> (i32, i32) {
    %c0_i32 = arith.constant 0 : i32
    %c0_i32_0 = arith.constant 0 : i32
    %c0_i32_1 = arith.constant 0 : i32
    return %c0_i32, %c0_i32_0 : i32, i32
  }
  func.func @transform_2(%arg0: i32) -> (i32, i32) {
    %c0_i32 = arith.constant 0 : i32
    %c0_i32_0 = arith.constant 0 : i32
    %c0_i32_1 = arith.constant 0 : i32
    return %c0_i32, %c0_i32_0 : i32, i32
  }
  func.func @transform_3(%arg0: i32) -> (i32, i32) {
    %c0_i32 = arith.constant 0 : i32
    %c0_i32_0 = arith.constant 0 : i32
    %c0_i32_1 = arith.constant 0 : i32
    return %c0_i32, %c0_i32_0 : i32, i32
  }
  func.func @transform_4(%arg0: i32) -> (i32, i32) {
    %c0_i32 = arith.constant 0 : i32
    %c0_i32_0 = arith.constant 0 : i32
    %c0_i32_1 = arith.constant 0 : i32
    return %c0_i32, %c0_i32_0 : i32, i32
  }
  func.func @transform_5(%arg0: i32) -> (i32, i32) {
    %c0_i32 = arith.constant 0 : i32
    %c0_i32_0 = arith.constant 0 : i32
    %c0_i32_1 = arith.constant 0 : i32
    return %c0_i32, %c0_i32_0 : i32, i32
  }
  func.func @transform_6(%arg0: i32) -> (i32, i32) {
    %c0_i32 = arith.constant 0 : i32
    %c0_i32_0 = arith.constant 0 : i32
    %c0_i32_1 = arith.constant 0 : i32
    return %c0_i32, %c0_i32_0 : i32, i32
  }
  func.func @transform_7(%arg0: i32) -> (i32, i32) {
    %c0_i32 = arith.constant 0 : i32
    %c0_i32_0 = arith.constant 0 : i32
    %c0_i32_1 = arith.constant 0 : i32
    return %c0_i32, %c0_i32_0 : i32, i32
  }
  func.func @transform_8(%arg0: i32) -> (i32, i32) {
    %c0_i32 = arith.constant 0 : i32
    %c0_i32_0 = arith.constant 0 : i32
    %c0_i32_1 = arith.constant 0 : i32
    return %c0_i32, %c0_i32_0 : i32, i32
  }
  func.func @transform_9(%arg0: i32) -> (i32, i32) {
    %c0_i32 = arith.constant 0 : i32
    %c0_i32_0 = arith.constant 0 : i32
    %c0_i32_1 = arith.constant 0 : i32
    return %c0_i32, %c0_i32_0 : i32, i32
  }
  func.func @transform_10(%arg0: i32) -> (i32, i32) {
    %c0_i32 = arith.constant 0 : i32
    %c0_i32_0 = arith.constant 0 : i32
    %c0_i32_1 = arith.constant 0 : i32
    return %c0_i32, %c0_i32_0 : i32, i32
  }
  func.func @transform_11(%arg0: i32) -> (i32, i32) {
    %c0_i32 = arith.constant 0 : i32
    %c0_i32_0 = arith.constant 0 : i32
    %c0_i32_1 = arith.constant 0 : i32
    return %c0_i32, %c0_i32_0 : i32, i32
  }
  func.func @transform_12(%arg0: i32) -> (i32, i32) {
    %c0_i32 = arith.constant 0 : i32
    %c0_i32_0 = arith.constant 0 : i32
    %c0_i32_1 = arith.constant 0 : i32
    return %c0_i32, %c0_i32_0 : i32, i32
  }
  func.func @transform_13(%arg0: i32) -> (i32, i32) {
    %c0_i32 = arith.constant 0 : i32
    %c0_i32_0 = arith.constant 0 : i32
    %c0_i32_1 = arith.constant 0 : i32
    return %c0_i32, %c0_i32_0 : i32, i32
  }
  func.func @transform_14(%arg0: i32) -> (i32, i32) {
    %c0_i32 = arith.constant 0 : i32
    %c0_i32_0 = arith.constant 0 : i32
    %c0_i32_1 = arith.constant 0 : i32
    return %c0_i32, %c0_i32_0 : i32, i32
  }
  func.func @transform_15(%arg0: i32) -> (i32, i32) {
    %c0_i32 = arith.constant 0 : i32
    %c0_i32_0 = arith.constant 0 : i32
    %c0_i32_1 = arith.constant 0 : i32
    return %c0_i32, %c0_i32_0 : i32, i32
  }
  func.func @transform_16(%arg0: i32) -> (i32, i32) {
    %c0_i32 = arith.constant 0 : i32
    %c0_i32_0 = arith.constant 0 : i32
    %c0_i32_1 = arith.constant 0 : i32
    return %c0_i32, %c0_i32_0 : i32, i32
  }
  func.func @transform_17(%arg0: i32) -> (i32, i32) {
    %c0_i32 = arith.constant 0 : i32
    %c0_i32_0 = arith.constant 0 : i32
    %c0_i32_1 = arith.constant 0 : i32
    return %c0_i32, %c0_i32_0 : i32, i32
  }
  func.func @transform_18(%arg0: i32) -> (i32, i32) {
    %c0_i32 = arith.constant 0 : i32
    %c0_i32_0 = arith.constant 0 : i32
    %c0_i32_1 = arith.constant 0 : i32
    return %c0_i32, %c0_i32_0 : i32, i32
  }
  func.func @transform_19(%arg0: i32) -> (i32, i32) {
    %c0_i32 = arith.constant 0 : i32
    %c0_i32_0 = arith.constant 0 : i32
    %c0_i32_1 = arith.constant 0 : i32
    return %c0_i32, %c0_i32_0 : i32, i32
  }
  func.func @transform_20(%arg0: i32) -> (i32, i32) {
    %c0_i32 = arith.constant 0 : i32
    %c0_i32_0 = arith.constant 0 : i32
    %c0_i32_1 = arith.constant 0 : i32
    return %c0_i32, %c0_i32_0 : i32, i32
  }
  func.func @transform_21(%arg0: i32) -> (i32, i32, i32) {
    %c0_i32 = arith.constant 0 : i32
    %c0_i32_0 = arith.constant 0 : i32
    %c0_i32_1 = arith.constant 0 : i32
    return %c0_i32, %arg0, %c0_i32_0 : i32, i32, i32
  }
}

</mosaic_0001>

<llo_original>
// kernel: _lambda_.1
$region0: #{_lambda_.1}
  #allocation0 [shape = 'u32[]', space=smem, size = 0x4, offset = 0x4, fixed_abs, tag = 'smem constant byte address 0x4 - core index']
  #allocation1 [shape = 'u32[144,128]{1,0:T(1,128)}', space=vmem, size = 0x12000, scoped, tag = 'internal scratch']
  %s0 = inlined_call_operand.vmem [shape: bf16[6,16,64], index: 0, kind: input, shape index: {}]
  %s1 = inlined_call_operand.vmem [shape: bf16[64,256], index: 1, kind: input, shape index: {}]
  %s2 = inlined_call_operand.vmem [shape: f32[1,256], index: 2, kind: input, shape index: {}]
  %s3 = inlined_call_operand.vmem [shape: bf16[256,256], index: 3, kind: input, shape index: {}]
  %s4 = inlined_call_operand.vmem [shape: f32[1,256], index: 4, kind: input, shape index: {}]
  %s5 = inlined_call_operand.vmem [shape: bf16[256,32], index: 5, kind: input, shape index: {}]
  %s6 = inlined_call_operand.vmem [shape: f32[1,32], index: 6, kind: input, shape index: {}]
  %s7 = inlined_call_operand.vmem [shape: bf16[32,96], index: 7, kind: input, shape index: {}]
  %s8 = inlined_call_operand.vmem [shape: f32[1,32], index: 8, kind: input, shape index: {}]
  %s9 = inlined_call_operand.vmem [shape: bf16[32,32], index: 9, kind: input, shape index: {}]
  %s10 = inlined_call_operand.vmem [shape: f32[1,32], index: 10, kind: input, shape index: {}]
  %s11 = inlined_call_operand.vmem [shape: bf16[32,32], index: 11, kind: input, shape index: {}]
  %s12 = inlined_call_operand.vmem [shape: f32[1,32], index: 12, kind: input, shape index: {}]
  %s13 = inlined_call_operand.vmem [shape: bf16[32,32], index: 13, kind: input, shape index: {}]
  %s14 = inlined_call_operand.vmem [shape: f32[1,32], index: 14, kind: input, shape index: {}]
  %s15 = inlined_call_operand.vmem [shape: bf16[32,64], index: 15, kind: input, shape index: {}]
  %s16 = inlined_call_operand.vmem [shape: f32[1,64], index: 16, kind: input, shape index: {}]
  %s17 = inlined_call_operand.vmem [shape: bf16[64,64], index: 17, kind: input, shape index: {}]
  %s18 = inlined_call_operand.vmem [shape: f32[1,64], index: 18, kind: input, shape index: {}]
  %s19 = inlined_call_operand.vmem [shape: bf16[64,8], index: 19, kind: input, shape index: {}]
  %s20 = inlined_call_operand.vmem [shape: f32[1,8], index: 20, kind: input, shape index: {}]
  %s21 = inlined_call_operand.vmem [shape: f32[6,16,8], index: 21, kind: output, shape index: {}]
  %s22 = sld [smem:[#allocation0]]
  $region94: #{_lambda_.1} parent=0
    _
  %s24 = ssub.s32 1, %s22
  %s25 = scalar_select 0, %s24, %s22
  // Predicated region
  $region2: #{_lambda_.1} parent=0 // pred_check
    _
  $region3: #{_lambda_.1} parent=0 // pred_check_branch
    %27 = sbr.rel (0) target = $region5
  $region4: #{_lambda_.1} parent=0 // pred_region
    _
  $region5: #{_lambda_.1} parent=0 // pred_fallthru
    _
  // Predicated region
  $region6: #{_lambda_.1} parent=0 // pred_check
    _
  $region7: #{_lambda_.1} parent=0 // pred_check_branch
    %29 = sbr.rel (0) target = $region9
  $region8: #{_lambda_.1} parent=0 // pred_region
    _
  $region9: #{_lambda_.1} parent=0 // pred_fallthru
    _
  // Predicated region
  $region10: #{_lambda_.1} parent=0 // pred_check
    _
  $region11: #{_lambda_.1} parent=0 // pred_check_branch
    %31 = sbr.rel (0) target = $region13
  $region12: #{_lambda_.1} parent=0 // pred_region
    _
  $region13: #{_lambda_.1} parent=0 // pred_fallthru
    _
  // Predicated region
  $region14: #{_lambda_.1} parent=0 // pred_check
    _
  $region15: #{_lambda_.1} parent=0 // pred_check_branch
    %33 = sbr.rel (0) target = $region17
  $region16: #{_lambda_.1} parent=0 // pred_region
    _
  $region17: #{_lambda_.1} parent=0 // pred_fallthru
    _
  // Predicated region
  $region18: #{_lambda_.1} parent=0 // pred_check
    _
  $region19: #{_lambda_.1} parent=0 // pred_check_branch
    %35 = sbr.rel (0) target = $region21
  $region20: #{_lambda_.1} parent=0 // pred_region
    _
  $region21: #{_lambda_.1} parent=0 // pred_fallthru
    _
  // Predicated region
  $region22: #{_lambda_.1} parent=0 // pred_check
    _
  $region23: #{_lambda_.1} parent=0 // pred_check_branch
    %37 = sbr.rel (0) target = $region25
  $region24: #{_lambda_.1} parent=0 // pred_region
    _
  $region25: #{_lambda_.1} parent=0 // pred_fallthru
    _
  // Predicated region
  $region26: #{_lambda_.1} parent=0 // pred_check
    _
  $region27: #{_lambda_.1} parent=0 // pred_check_branch
    %39 = sbr.rel (0) target = $region29
  $region28: #{_lambda_.1} parent=0 // pred_region
    _
  $region29: #{_lambda_.1} parent=0 // pred_fallthru
    _
  // Predicated region
  $region30: #{_lambda_.1} parent=0 // pred_check
    _
  $region31: #{_lambda_.1} parent=0 // pred_check_branch
    %41 = sbr.rel (0) target = $region33
  $region32: #{_lambda_.1} parent=0 // pred_region
    _
  $region33: #{_lambda_.1} parent=0 // pred_fallthru
    _
  // Predicated region
  $region34: #{_lambda_.1} parent=0 // pred_check
    _
  $region35: #{_lambda_.1} parent=0 // pred_check_branch
    %43 = sbr.rel (0) target = $region37
  $region36: #{_lambda_.1} parent=0 // pred_region
    _
  $region37: #{_lambda_.1} parent=0 // pred_fallthru
    _
  // Predicated region
  $region38: #{_lambda_.1} parent=0 // pred_check
    _
  $region39: #{_lambda_.1} parent=0 // pred_check_branch
    %45 = sbr.rel (0) target = $region41
  $region40: #{_lambda_.1} parent=0 // pred_region
    _
  $region41: #{_lambda_.1} parent=0 // pred_fallthru
    _
  // Predicated region
  $region42: #{_lambda_.1} parent=0 // pred_check
    _
  $region43: #{_lambda_.1} parent=0 // pred_check_branch
    %47 = sbr.rel (0) target = $region45
  $region44: #{_lambda_.1} parent=0 // pred_region
    _
  $region45: #{_lambda_.1} parent=0 // pred_fallthru
    _
  // Predicated region
  $region46: #{_lambda_.1} parent=0 // pred_check
    _
  $region47: #{_lambda_.1} parent=0 // pred_check_branch
    %49 = sbr.rel (0) target = $region49
  $region48: #{_lambda_.1} parent=0 // pred_region
    _
  $region49: #{_lambda_.1} parent=0 // pred_fallthru
    _
  // Predicated region
  $region50: #{_lambda_.1} parent=0 // pred_check
    _
  $region51: #{_lambda_.1} parent=0 // pred_check_branch
    %51 = sbr.rel (0) target = $region53
  $region52: #{_lambda_.1} parent=0 // pred_region
    _
  $region53: #{_lambda_.1} parent=0 // pred_fallthru
    _
  // Predicated region
  $region54: #{_lambda_.1} parent=0 // pred_check
    _
  $region55: #{_lambda_.1} parent=0 // pred_check_branch
    %53 = sbr.rel (0) target = $region57
  $region56: #{_lambda_.1} parent=0 // pred_region
    _
  $region57: #{_lambda_.1} parent=0 // pred_fallthru
    _
  // Predicated region
  $region58: #{_lambda_.1} parent=0 // pred_check
    _
  $region59: #{_lambda_.1} parent=0 // pred_check_branch
    %55 = sbr.rel (0) target = $region61
  $region60: #{_lambda_.1} parent=0 // pred_region
    _
  $region61: #{_lambda_.1} parent=0 // pred_fallthru
    _
  // Predicated region
  $region62: #{_lambda_.1} parent=0 // pred_check
    _
  $region63: #{_lambda_.1} parent=0 // pred_check_branch
    %57 = sbr.rel (0) target = $region65
  $region64: #{_lambda_.1} parent=0 // pred_region
    _
  $region65: #{_lambda_.1} parent=0 // pred_fallthru
    _
  // Predicated region
  $region66: #{_lambda_.1} parent=0 // pred_check
    _
  $region67: #{_lambda_.1} parent=0 // pred_check_branch
    %59 = sbr.rel (0) target = $region69
  $region68: #{_lambda_.1} parent=0 // pred_region
    _
  $region69: #{_lambda_.1} parent=0 // pred_fallthru
    _
  // Predicated region
  $region70: #{_lambda_.1} parent=0 // pred_check
    _
  $region71: #{_lambda_.1} parent=0 // pred_check_branch
    %61 = sbr.rel (0) target = $region73
  $region72: #{_lambda_.1} parent=0 // pred_region
    _
  $region73: #{_lambda_.1} parent=0 // pred_fallthru
    _
  // Predicated region
  $region74: #{_lambda_.1} parent=0 // pred_check
    _
  $region75: #{_lambda_.1} parent=0 // pred_check_branch
    %63 = sbr.rel (0) target = $region77
  $region76: #{_lambda_.1} parent=0 // pred_region
    _
  $region77: #{_lambda_.1} parent=0 // pred_fallthru
    _
  // Predicated region
  $region78: #{_lambda_.1} parent=0 // pred_check
    _
  $region79: #{_lambda_.1} parent=0 // pred_check_branch
    %65 = sbr.rel (0) target = $region81
  $region80: #{_lambda_.1} parent=0 // pred_region
    _
  $region81: #{_lambda_.1} parent=0 // pred_fallthru
    _
  // Predicated region
  $region82: #{_lambda_.1} parent=0 // pred_check
    _
  $region83: #{_lambda_.1} parent=0 // pred_check_branch
    %67 = sbr.rel (0) target = $region85
  $region84: #{_lambda_.1} parent=0 // pred_region
    _
  $region85: #{_lambda_.1} parent=0 // pred_fallthru
    _
  %v69 = vld [vmem:[%s0] sm:$0xf]
  %v70 = vld [vmem:[%s0 + $0x4] sm:$0xf]
  %v71 = vld [vmem:[%s0 + $0x8] sm:$0xf]
  %v72 = vld [vmem:[%s0 + $0xc] sm:$0xf]
  %v73 = vld [vmem:[%s0 + $0x10] sm:$0xf]
  %v74 = vld [vmem:[%s0 + $0x14] sm:$0xf]
  %v75 = vld [vmem:[%s0 + $0x18] sm:$0xf]
  %v76 = vld [vmem:[%s0 + $0x1c] sm:$0xf]
  %v77 = vld [vmem:[%s0 + $0x20] sm:$0xf]
  %v78 = vld [vmem:[%s0 + $0x24] sm:$0xf]
  %v79 = vld [vmem:[%s0 + $0x28] sm:$0xf]
  %v80 = vld [vmem:[%s0 + $0x2c] sm:$0xf]
  %v81 = vld [vmem:[%s1] sm:$0xff]
  %v82 = vld [vmem:[%s1 + $0x8] sm:$0xff]
  %v83 = vld [vmem:[%s1 + $0x10] sm:$0xff]
  %v84 = vld [vmem:[%s1 + $0x18] sm:$0xff]
  %v85 = vld [vmem:[%s1 + $0x20] sm:$0xff]
  %v86 = vld [vmem:[%s1 + $0x28] sm:$0xff]
  %v87 = vld [vmem:[%s1 + $0x30] sm:$0xff]
  %v88 = vld [vmem:[%s1 + $0x38] sm:$0xff]
  %v89 = vld [vmem:[%s2] sm:$0x3]
  %v91 = vlaneseq
  %v92 = vshrl.u32 %v91, 7
  %v93 = vsub.s32 0, %v92
  %v94 = vrot.slane %v89, %v93
  %v95 = vlaneseq
  %v96 = vshrl.u32 %v95, 7
  %v97 = vsub.s32 1, %v96
  %v98 = vrot.slane %v89, %v97
  %v113 = vunpack.c.l.b16 %v69
  %v114 = vunpack.c.l.b16 %v70
  %v115 = vunpack.c.l.b16 %v71
  %v116 = vunpack.c.l.b16 %v72
  %v117 = vunpack.c.l.b16 %v73
  %v118 = vunpack.c.l.b16 %v74
  %v119 = vunpack.c.l.b16 %v75
  %v120 = vunpack.c.l.b16 %v76
  %v121 = vunpack.c.l.b16 %v77
  %v122 = vunpack.c.l.b16 %v78
  %v123 = vunpack.c.l.b16 %v79
  %v124 = vunpack.c.l.b16 %v80
  %v125 = vpack.c.b16 %v114, %v113
  %v126 = vpack.c.b16 %v116, %v115
  %v127 = vpack.c.b16 %v118, %v117
  %v128 = vpack.c.b16 %v120, %v119
  %v129 = vpack.c.b16 %v122, %v121
  %v130 = vpack.c.b16 %v124, %v123
  %v139 = vunpack.c.l.b16 %v81
  %v140 = vunpack.c.h.b16 %v81
  %v141 = vunpack.c.l.b16 %v82
  %v142 = vunpack.c.h.b16 %v82
  %v143 = vunpack.c.l.b16 %v83
  %v144 = vunpack.c.h.b16 %v83
  %v145 = vunpack.c.l.b16 %v84
  %v146 = vunpack.c.h.b16 %v84
  %v147 = vunpack.c.l.b16 %v85
  %v148 = vunpack.c.h.b16 %v85
  %v149 = vunpack.c.l.b16 %v86
  %v150 = vunpack.c.h.b16 %v86
  %v151 = vunpack.c.l.b16 %v87
  %v152 = vunpack.c.h.b16 %v87
  %v153 = vunpack.c.l.b16 %v88
  %v154 = vunpack.c.h.b16 %v88
  %v155 = vpack.c.b16 %v141, %v139
  %v156 = vpack.c.b16 %v142, %v140
  %v157 = vpack.c.b16 %v145, %v143
  %v158 = vpack.c.b16 %v146, %v144
  %v159 = vpack.c.b16 %v149, %v147
  %v160 = vpack.c.b16 %v150, %v148
  %v161 = vpack.c.b16 %v153, %v151
  %v162 = vpack.c.b16 %v154, %v152
  %vm171 = vcmask 523264
  %v173 = vsel %vm171, %v125, 0
  %v176 = vsel %vm171, %v126, 0
  %v179 = vsel %vm171, %v127, 0
  %v182 = vsel %vm171, %v128, 0
  %v185 = vsel %vm171, %v129, 0
  %v188 = vsel %vm171, %v130, 0
  %190 = vmatprep.subr.bf16.mxu0 %v156
  %191 = vmatpush1.bf16.msra.mxu0 %v155
  %192 = vmatprep.subr.bf16.mxu0 %v158
  %193 = vmatpush1.bf16.msra.mxu0 %v157
  %194 = vmatprep.subr.bf16.mxu0 %v160
  %195 = vmatpush1.bf16.msra.mxu0 %v159
  %196 = vmatprep.subr.bf16.mxu0 %v162
  %197 = vmatpush1.bf16.msra.mxu0 %v161
  %198 = vmatprep.subr.bf16.mxu0 0
  %199 = vmatpush1.bf16.msra.mxu0 0
  %200 = vmatprep.subr.bf16.mxu0 0
  %201 = vmatpush1.bf16.msra.mxu0 0
  %202 = vmatprep.subr.bf16.mxu0 0
  %203 = vmatpush1.bf16.msra.mxu0 0
  %204 = vmatprep.subr.bf16.mxu0 0
  %205 = vmatpush1.bf16.msra.mxu0 0
  %206 = vmatprep.subr.bf16.mxu0 0
  %207 = vmatpush1.bf16.msra.mxu0 0
  %208 = vmatprep.subr.bf16.mxu0 0
  %209 = vmatpush1.bf16.msra.mxu0 0
  %210 = vmatprep.subr.bf16.mxu0 0
  %211 = vmatpush1.bf16.msra.mxu0 0
  %212 = vmatprep.subr.bf16.mxu0 0
  %213 = vmatpush1.bf16.msra.mxu0 0
  %214 = vmatprep.subr.bf16.mxu0 0
  %215 = vmatpush1.bf16.msra.mxu0 0
  %216 = vmatprep.subr.bf16.mxu0 0
  %217 = vmatpush1.bf16.msra.mxu0 0
  %218 = vmatprep.subr.bf16.mxu0 0
  %219 = vmatpush1.bf16.msra.mxu0 0
  %220 = vmatprep.subr.bf16.mxu0 0
  %221 = vmatpush1.bf16.msra.mxu0 0
  %222 = vmatprep.mubr.bf16.mxu0 0
  %223 = vmatmul.mubr.bf16.gmra.mrb[0].mxu0 %v173
  %v224 = vpop.f32.mrb[0].mxu0
  %v225 = vadd.f32 %v94, %v224
  %v226 = vpop.f32.mrb[0].mxu0
  %v227 = vadd.f32 %v98, %v226
  %v228 = vpop.f32.mrb[0].mxu0
  %v229 = vadd.f32 %v94, %v228
  %v230 = vpop.f32.mrb[0].mxu0
  %v231 = vadd.f32 %v98, %v230
  %232 = vmatprep.mubr.bf16.mxu0 0
  %233 = vmatmul.mubr.bf16.gmra.mrb[0].mxu0 %v176
  %v234 = vpop.f32.mrb[0].mxu0
  %v235 = vadd.f32 %v94, %v234
  %v236 = vpop.f32.mrb[0].mxu0
  %v237 = vadd.f32 %v98, %v236
  %v238 = vpop.f32.mrb[0].mxu0
  %v239 = vadd.f32 %v94, %v238
  %v240 = vpop.f32.mrb[0].mxu0
  %v241 = vadd.f32 %v98, %v240
  %242 = vmatprep.mubr.bf16.mxu0 0
  %243 = vmatmul.mubr.bf16.gmra.mrb[0].mxu0 %v179
  %v244 = vpop.f32.mrb[0].mxu0
  %v245 = vadd.f32 %v94, %v244
  %v246 = vpop.f32.mrb[0].mxu0
  %v247 = vadd.f32 %v98, %v246
  %v248 = vpop.f32.mrb[0].mxu0
  %v249 = vadd.f32 %v94, %v248
  %v250 = vpop.f32.mrb[0].mxu0
  %v251 = vadd.f32 %v98, %v250
  %252 = vmatprep.mubr.bf16.mxu0 0
  %253 = vmatmul.mubr.bf16.gmra.mrb[0].mxu0 %v182
  %v254 = vpop.f32.mrb[0].mxu0
  %v255 = vadd.f32 %v94, %v254
  %v256 = vpop.f32.mrb[0].mxu0
  %v257 = vadd.f32 %v98, %v256
  %v258 = vpop.f32.mrb[0].mxu0
  %v259 = vadd.f32 %v94, %v258
  %v260 = vpop.f32.mrb[0].mxu0
  %v261 = vadd.f32 %v98, %v260
  %262 = vmatprep.mubr.bf16.mxu0 0
  %263 = vmatmul.mubr.bf16.gmra.mrb[0].mxu0 %v185
  %v264 = vpop.f32.mrb[0].mxu0
  %v265 = vadd.f32 %v94, %v264
  %v266 = vpop.f32.mrb[0].mxu0
  %v267 = vadd.f32 %v98, %v266
  %v268 = vpop.f32.mrb[0].mxu0
  %v269 = vadd.f32 %v94, %v268
  %v270 = vpop.f32.mrb[0].mxu0
  %v271 = vadd.f32 %v98, %v270
  %272 = vmatprep.mubr.bf16.mxu0 0
  %273 = vmatmul.mubr.bf16.gmra.mrb[0].mxu0 %v188
  %v274 = vpop.f32.mrb[0].mxu0
  %v275 = vadd.f32 %v94, %v274
  %v276 = vpop.f32.mrb[0].mxu0
  %v277 = vadd.f32 %v98, %v276
  %v278 = vpop.f32.mrb[0].mxu0
  %v279 = vadd.f32 %v94, %v278
  %v280 = vpop.f32.mrb[0].mxu0
  %v281 = vadd.f32 %v98, %v280
  %282 = vdwg.mxu0
  %v283 = vmax.f32 %v225, 0.0
  %v284 = vmax.f32 %v227, 0.0
  %v285 = vmax.f32 %v229, 0.0
  %v286 = vmax.f32 %v231, 0.0
  %v287 = vmax.f32 %v235, 0.0
  %v288 = vmax.f32 %v237, 0.0
  %v289 = vmax.f32 %v239, 0.0
  %v290 = vmax.f32 %v241, 0.0
  %v291 = vmax.f32 %v245, 0.0
  %v292 = vmax.f32 %v247, 0.0
  %v293 = vmax.f32 %v249, 0.0
  %v294 = vmax.f32 %v251, 0.0
  %v295 = vmax.f32 %v255, 0.0
  %v296 = vmax.f32 %v257, 0.0
  %v297 = vmax.f32 %v259, 0.0
  %v298 = vmax.f32 %v261, 0.0
  %v299 = vmax.f32 %v265, 0.0
  %v300 = vmax.f32 %v267, 0.0
  %v301 = vmax.f32 %v269, 0.0
  %v302 = vmax.f32 %v271, 0.0
  %v303 = vmax.f32 %v275, 0.0
  %v304 = vmax.f32 %v277, 0.0
  %v305 = vmax.f32 %v279, 0.0
  %v306 = vmax.f32 %v281, 0.0
  %v307 = vpack.c.bf16 %v285, %v283
  %v308 = vpack.c.bf16 %v286, %v284
  %v309 = vpack.c.bf16 %v289, %v287
  %v310 = vpack.c.bf16 %v290, %v288
  %v311 = vpack.c.bf16 %v293, %v291
  %v312 = vpack.c.bf16 %v294, %v292
  %v313 = vpack.c.bf16 %v297, %v295
  %v314 = vpack.c.bf16 %v298, %v296
  %v315 = vpack.c.bf16 %v301, %v299
  %v316 = vpack.c.bf16 %v302, %v300
  %v317 = vpack.c.bf16 %v305, %v303
  %v318 = vpack.c.bf16 %v306, %v304
  %v319 = vld [vmem:[%s3] sm:$0xff]
  %v320 = vld [vmem:[%s3 + $0x8] sm:$0xff]
  %v321 = vld [vmem:[%s3 + $0x10] sm:$0xff]
  %v322 = vld [vmem:[%s3 + $0x18] sm:$0xff]
  %v323 = vld [vmem:[%s3 + $0x20] sm:$0xff]
  %v324 = vld [vmem:[%s3 + $0x28] sm:$0xff]
  %v325 = vld [vmem:[%s3 + $0x30] sm:$0xff]
  %v326 = vld [vmem:[%s3 + $0x38] sm:$0xff]
  %v327 = vld [vmem:[%s3 + $0x40] sm:$0xff]
  %v328 = vld [vmem:[%s3 + $0x48] sm:$0xff]
  %v329 = vld [vmem:[%s3 + $0x50] sm:$0xff]
  %v330 = vld [vmem:[%s3 + $0x58] sm:$0xff]
  %v331 = vld [vmem:[%s3 + $0x60] sm:$0xff]
  %v332 = vld [vmem:[%s3 + $0x68] sm:$0xff]
  %v333 = vld [vmem:[%s3 + $0x70] sm:$0xff]
  %v334 = vld [vmem:[%s3 + $0x78] sm:$0xff]
  %v335 = vld [vmem:[%s3 + $0x80] sm:$0xff]
  %v336 = vld [vmem:[%s3 + $0x88] sm:$0xff]
  %v337 = vld [vmem:[%s3 + $0x90] sm:$0xff]
  %v338 = vld [vmem:[%s3 + $0x98] sm:$0xff]
  %v339 = vld [vmem:[%s3 + $0xa0] sm:$0xff]
  %v340 = vld [vmem:[%s3 + $0xa8] sm:$0xff]
  %v341 = vld [vmem:[%s3 + $0xb0] sm:$0xff]
  %v342 = vld [vmem:[%s3 + $0xb8] sm:$0xff]
  %v343 = vld [vmem:[%s3 + $0xc0] sm:$0xff]
  %v344 = vld [vmem:[%s3 + $0xc8] sm:$0xff]
  %v345 = vld [vmem:[%s3 + $0xd0] sm:$0xff]
  %v346 = vld [vmem:[%s3 + $0xd8] sm:$0xff]
  %v347 = vld [vmem:[%s3 + $0xe0] sm:$0xff]
  %v348 = vld [vmem:[%s3 + $0xe8] sm:$0xff]
  %v349 = vld [vmem:[%s3 + $0xf0] sm:$0xff]
  %v350 = vld [vmem:[%s3 + $0xf8] sm:$0xff]
  %v351 = vld [vmem:[%s4] sm:$0x3]
  %v353 = vlaneseq
  %v354 = vshrl.u32 %v353, 7
  %v355 = vsub.s32 0, %v354
  %v356 = vrot.slane %v351, %v355
  %v357 = vlaneseq
  %v358 = vshrl.u32 %v357, 7
  %v359 = vsub.s32 1, %v358
  %v360 = vrot.slane %v351, %v359
  %v395 = vunpack.c.l.b16 %v319
  %v396 = vunpack.c.h.b16 %v319
  %v397 = vunpack.c.l.b16 %v320
  %v398 = vunpack.c.h.b16 %v320
  %v399 = vunpack.c.l.b16 %v321
  %v400 = vunpack.c.h.b16 %v321
  %v401 = vunpack.c.l.b16 %v322
  %v402 = vunpack.c.h.b16 %v322
  %v403 = vunpack.c.l.b16 %v323
  %v404 = vunpack.c.h.b16 %v323
  %v405 = vunpack.c.l.b16 %v324
  %v406 = vunpack.c.h.b16 %v324
  %v407 = vunpack.c.l.b16 %v325
  %v408 = vunpack.c.h.b16 %v325
  %v409 = vunpack.c.l.b16 %v326
  %v410 = vunpack.c.h.b16 %v326
  %v411 = vunpack.c.l.b16 %v327
  %v412 = vunpack.c.h.b16 %v327
  %v413 = vunpack.c.l.b16 %v328
  %v414 = vunpack.c.h.b16 %v328
  %v415 = vunpack.c.l.b16 %v329
  %v416 = vunpack.c.h.b16 %v329
  %v417 = vunpack.c.l.b16 %v330
  %v418 = vunpack.c.h.b16 %v330
  %v419 = vunpack.c.l.b16 %v331
  %v420 = vunpack.c.h.b16 %v331
  %v421 = vunpack.c.l.b16 %v332
  %v422 = vunpack.c.h.b16 %v332
  %v423 = vunpack.c.l.b16 %v333
  %v424 = vunpack.c.h.b16 %v333
  %v425 = vunpack.c.l.b16 %v334
  %v426 = vunpack.c.h.b16 %v334
  %v427 = vunpack.c.l.b16 %v335
  %v428 = vunpack.c.h.b16 %v335
  %v429 = vunpack.c.l.b16 %v336
  %v430 = vunpack.c.h.b16 %v336
  %v431 = vunpack.c.l.b16 %v337
  %v432 = vunpack.c.h.b16 %v337
  %v433 = vunpack.c.l.b16 %v338
  %v434 = vunpack.c.h.b16 %v338
  %v435 = vunpack.c.l.b16 %v339
  %v436 = vunpack.c.h.b16 %v339
  %v437 = vunpack.c.l.b16 %v340
  %v438 = vunpack.c.h.b16 %v340
  %v439 = vunpack.c.l.b16 %v341
  %v440 = vunpack.c.h.b16 %v341
  %v441 = vunpack.c.l.b16 %v342
  %v442 = vunpack.c.h.b16 %v342
  %v443 = vunpack.c.l.b16 %v343
  %v444 = vunpack.c.h.b16 %v343
  %v445 = vunpack.c.l.b16 %v344
  %v446 = vunpack.c.h.b16 %v344
  %v447 = vunpack.c.l.b16 %v345
  %v448 = vunpack.c.h.b16 %v345
  %v449 = vunpack.c.l.b16 %v346
  %v450 = vunpack.c.h.b16 %v346
  %v451 = vunpack.c.l.b16 %v347
  %v452 = vunpack.c.h.b16 %v347
  %v453 = vunpack.c.l.b16 %v348
  %v454 = vunpack.c.h.b16 %v348
  %v455 = vunpack.c.l.b16 %v349
  %v456 = vunpack.c.h.b16 %v349
  %v457 = vunpack.c.l.b16 %v350
  %v458 = vunpack.c.h.b16 %v350
  %v459 = vpack.c.b16 %v397, %v395
  %v460 = vpack.c.b16 %v398, %v396
  %v461 = vpack.c.b16 %v401, %v399
  %v462 = vpack.c.b16 %v402, %v400
  %v463 = vpack.c.b16 %v405, %v403
  %v464 = vpack.c.b16 %v406, %v404
  %v465 = vpack.c.b16 %v409, %v407
  %v466 = vpack.c.b16 %v410, %v408
  %v467 = vpack.c.b16 %v413, %v411
  %v468 = vpack.c.b16 %v414, %v412
  %v469 = vpack.c.b16 %v417, %v415
  %v470 = vpack.c.b16 %v418, %v416
  %v471 = vpack.c.b16 %v421, %v419
  %v472 = vpack.c.b16 %v422, %v420
  %v473 = vpack.c.b16 %v425, %v423
  %v474 = vpack.c.b16 %v426, %v424
  %v475 = vpack.c.b16 %v429, %v427
  %v476 = vpack.c.b16 %v430, %v428
  %v477 = vpack.c.b16 %v433, %v431
  %v478 = vpack.c.b16 %v434, %v432
  %v479 = vpack.c.b16 %v437, %v435
  %v480 = vpack.c.b16 %v438, %v436
  %v481 = vpack.c.b16 %v441, %v439
  %v482 = vpack.c.b16 %v442, %v440
  %v483 = vpack.c.b16 %v445, %v443
  %v484 = vpack.c.b16 %v446, %v444
  %v485 = vpack.c.b16 %v449, %v447
  %v486 = vpack.c.b16 %v450, %v448
  %v487 = vpack.c.b16 %v453, %v451
  %v488 = vpack.c.b16 %v454, %v452
  %v489 = vpack.c.b16 %v457, %v455
  %v490 = vpack.c.b16 %v458, %v456
  %523 = vmatprep.subr.bf16.mxu0 %v460
  %524 = vmatpush1.bf16.msra.mxu0 %v459
  %525 = vmatprep.subr.bf16.mxu0 %v462
  %526 = vmatpush1.bf16.msra.mxu0 %v461
  %527 = vmatprep.subr.bf16.mxu0 %v464
  %528 = vmatpush1.bf16.msra.mxu0 %v463
  %529 = vmatprep.subr.bf16.mxu0 %v466
  %530 = vmatpush1.bf16.msra.mxu0 %v465
  %531 = vmatprep.subr.bf16.mxu0 %v468
  %532 = vmatpush1.bf16.msra.mxu0 %v467
  %533 = vmatprep.subr.bf16.mxu0 %v470
  %534 = vmatpush1.bf16.msra.mxu0 %v469
  %535 = vmatprep.subr.bf16.mxu0 %v472
  %536 = vmatpush1.bf16.msra.mxu0 %v471
  %537 = vmatprep.subr.bf16.mxu0 %v474
  %538 = vmatpush1.bf16.msra.mxu0 %v473
  %539 = vmatprep.subr.bf16.mxu0 %v476
  %540 = vmatpush1.bf16.msra.mxu0 %v475
  %541 = vmatprep.subr.bf16.mxu0 %v478
  %542 = vmatpush1.bf16.msra.mxu0 %v477
  %543 = vmatprep.subr.bf16.mxu0 %v480
  %544 = vmatpush1.bf16.msra.mxu0 %v479
  %545 = vmatprep.subr.bf16.mxu0 %v482
  %546 = vmatpush1.bf16.msra.mxu0 %v481
  %547 = vmatprep.subr.bf16.mxu0 %v484
  %548 = vmatpush1.bf16.msra.mxu0 %v483
  %549 = vmatprep.subr.bf16.mxu0 %v486
  %550 = vmatpush1.bf16.msra.mxu0 %v485
  %551 = vmatprep.subr.bf16.mxu0 %v488
  %552 = vmatpush1.bf16.msra.mxu0 %v487
  %553 = vmatprep.subr.bf16.mxu0 %v490
  %554 = vmatpush1.bf16.msra.mxu0 %v489
  %555 = vmatprep.mubr.bf16.mxu0 %v308
  %556 = vmatmul.mubr.bf16.gmra.mrb[0].mxu0 %v307
  %v557 = vpop.f32.mrb[0].mxu0
  %v558 = vadd.f32 %v356, %v557
  %v559 = vpop.f32.mrb[0].mxu0
  %v560 = vadd.f32 %v360, %v559
  %v561 = vpop.f32.mrb[0].mxu0
  %v562 = vadd.f32 %v356, %v561
  %v563 = vpop.f32.mrb[0].mxu0
  %v564 = vadd.f32 %v360, %v563
  %565 = vmatprep.mubr.bf16.mxu0 %v310
  %566 = vmatmul.mubr.bf16.gmra.mrb[0].mxu0 %v309
  %v567 = vpop.f32.mrb[0].mxu0
  %v568 = vadd.f32 %v356, %v567
  %v569 = vpop.f32.mrb[0].mxu0
  %v570 = vadd.f32 %v360, %v569
  %v571 = vpop.f32.mrb[0].mxu0
  %v572 = vadd.f32 %v356, %v571
  %v573 = vpop.f32.mrb[0].mxu0
  %v574 = vadd.f32 %v360, %v573
  %575 = vmatprep.mubr.bf16.mxu0 %v312
  %576 = vmatmul.mubr.bf16.gmra.mrb[0].mxu0 %v311
  %v577 = vpop.f32.mrb[0].mxu0
  %v578 = vadd.f32 %v356, %v577
  %v579 = vpop.f32.mrb[0].mxu0
  %v580 = vadd.f32 %v360, %v579
  %v581 = vpop.f32.mrb[0].mxu0
  %v582 = vadd.f32 %v356, %v581
  %v583 = vpop.f32.mrb[0].mxu0
  %v584 = vadd.f32 %v360, %v583
  %585 = vmatprep.mubr.bf16.mxu0 %v314
  %586 = vmatmul.mubr.bf16.gmra.mrb[0].mxu0 %v313
  %v587 = vpop.f32.mrb[0].mxu0
  %v588 = vadd.f32 %v356, %v587
  %v589 = vpop.f32.mrb[0].mxu0
  %v590 = vadd.f32 %v360, %v589
  %v591 = vpop.f32.mrb[0].mxu0
  %v592 = vadd.f32 %v356, %v591
  %v593 = vpop.f32.mrb[0].mxu0
  %v594 = vadd.f32 %v360, %v593
  %595 = vmatprep.mubr.bf16.mxu0 %v316
  %596 = vmatmul.mubr.bf16.gmra.mrb[0].mxu0 %v315
  %v597 = vpop.f32.mrb[0].mxu0
  %v598 = vadd.f32 %v356, %v597
  %v599 = vpop.f32.mrb[0].mxu0
  %v600 = vadd.f32 %v360, %v599
  %v601 = vpop.f32.mrb[0].mxu0
  %v602 = vadd.f32 %v356, %v601
  %v603 = vpop.f32.mrb[0].mxu0
  %v604 = vadd.f32 %v360, %v603
  %605 = vmatprep.mubr.bf16.mxu0 %v318
  %606 = vmatmul.mubr.bf16.gmra.mrb[0].mxu0 %v317
  %v607 = vpop.f32.mrb[0].mxu0
  %v608 = vadd.f32 %v356, %v607
  %v609 = vpop.f32.mrb[0].mxu0
  %v610 = vadd.f32 %v360, %v609
  %v611 = vpop.f32.mrb[0].mxu0
  %v612 = vadd.f32 %v356, %v611
  %v613 = vpop.f32.mrb[0].mxu0
  %v614 = vadd.f32 %v360, %v613
  %615 = vdwg.mxu0
  %v616 = vmax.f32 %v558, 0.0
  %v617 = vmax.f32 %v560, 0.0
  %v618 = vmax.f32 %v562, 0.0
  %v619 = vmax.f32 %v564, 0.0
  %v620 = vmax.f32 %v568, 0.0
  %v621 = vmax.f32 %v570, 0.0
  %v622 = vmax.f32 %v572, 0.0
  %v623 = vmax.f32 %v574, 0.0
  %v624 = vmax.f32 %v578, 0.0
  %v625 = vmax.f32 %v580, 0.0
  %v626 = vmax.f32 %v582, 0.0
  %v627 = vmax.f32 %v584, 0.0
  %v628 = vmax.f32 %v588, 0.0
  %v629 = vmax.f32 %v590, 0.0
  %v630 = vmax.f32 %v592, 0.0
  %v631 = vmax.f32 %v594, 0.0
  %v632 = vmax.f32 %v598, 0.0
  %v633 = vmax.f32 %v600, 0.0
  %v634 = vmax.f32 %v602, 0.0
  %v635 = vmax.f32 %v604, 0.0
  %v636 = vmax.f32 %v608, 0.0
  %v637 = vmax.f32 %v610, 0.0
  %v638 = vmax.f32 %v612, 0.0
  %v639 = vmax.f32 %v614, 0.0
  %v640 = vpack.c.bf16 %v618, %v616
  %v641 = vpack.c.bf16 %v619, %v617
  %v642 = vpack.c.bf16 %v622, %v620
  %v643 = vpack.c.bf16 %v623, %v621
  %v644 = vpack.c.bf16 %v626, %v624
  %v645 = vpack.c.bf16 %v627, %v625
  %v646 = vpack.c.bf16 %v630, %v628
  %v647 = vpack.c.bf16 %v631, %v629
  %v648 = vpack.c.bf16 %v634, %v632
  %v649 = vpack.c.bf16 %v635, %v633
  %v650 = vpack.c.bf16 %v638, %v636
  %v651 = vpack.c.bf16 %v639, %v637
  %v652 = vld [vmem:[%s5] sm:$0xf]
  %v653 = vld [vmem:[%s5 + $0x4] sm:$0xf]
  %v654 = vld [vmem:[%s5 + $0x8] sm:$0xf]
  %v655 = vld [vmem:[%s5 + $0xc] sm:$0xf]
  %v656 = vld [vmem:[%s5 + $0x10] sm:$0xf]
  %v657 = vld [vmem:[%s5 + $0x14] sm:$0xf]
  %v658 = vld [vmem:[%s5 + $0x18] sm:$0xf]
  %v659 = vld [vmem:[%s5 + $0x1c] sm:$0xf]
  %v660 = vld [vmem:[%s5 + $0x20] sm:$0xf]
  %v661 = vld [vmem:[%s5 + $0x24] sm:$0xf]
  %v662 = vld [vmem:[%s5 + $0x28] sm:$0xf]
  %v663 = vld [vmem:[%s5 + $0x2c] sm:$0xf]
  %v664 = vld [vmem:[%s5 + $0x30] sm:$0xf]
  %v665 = vld [vmem:[%s5 + $0x34] sm:$0xf]
  %v666 = vld [vmem:[%s5 + $0x38] sm:$0xf]
  %v667 = vld [vmem:[%s5 + $0x3c] sm:$0xf]
  %v668 = vld [vmem:[%s5 + $0x40] sm:$0xf]
  %v669 = vld [vmem:[%s5 + $0x44] sm:$0xf]
  %v670 = vld [vmem:[%s5 + $0x48] sm:$0xf]
  %v671 = vld [vmem:[%s5 + $0x4c] sm:$0xf]
  %v672 = vld [vmem:[%s5 + $0x50] sm:$0xf]
  %v673 = vld [vmem:[%s5 + $0x54] sm:$0xf]
  %v674 = vld [vmem:[%s5 + $0x58] sm:$0xf]
  %v675 = vld [vmem:[%s5 + $0x5c] sm:$0xf]
  %v676 = vld [vmem:[%s5 + $0x60] sm:$0xf]
  %v677 = vld [vmem:[%s5 + $0x64] sm:$0xf]
  %v678 = vld [vmem:[%s5 + $0x68] sm:$0xf]
  %v679 = vld [vmem:[%s5 + $0x6c] sm:$0xf]
  %v680 = vld [vmem:[%s5 + $0x70] sm:$0xf]
  %v681 = vld [vmem:[%s5 + $0x74] sm:$0xf]
  %v682 = vld [vmem:[%s5 + $0x78] sm:$0xf]
  %v683 = vld [vmem:[%s5 + $0x7c] sm:$0xf]
  %v684 = vld [vmem:[%s6] sm:$0x1]
  %v686 = vlaneseq
  %v687 = vshrl.u32 %v686, 7
  %v688 = vsub.s32 0, %v687
  %v689 = vrot.slane %v684, %v688
  %v723 = vunpack.c.l.b16 %v652
  %v724 = vunpack.c.l.b16 %v653
  %v725 = vunpack.c.l.b16 %v654
  %v726 = vunpack.c.l.b16 %v655
  %v727 = vunpack.c.l.b16 %v656
  %v728 = vunpack.c.l.b16 %v657
  %v729 = vunpack.c.l.b16 %v658
  %v730 = vunpack.c.l.b16 %v659
  %v731 = vunpack.c.l.b16 %v660
  %v732 = vunpack.c.l.b16 %v661
  %v733 = vunpack.c.l.b16 %v662
  %v734 = vunpack.c.l.b16 %v663
  %v735 = vunpack.c.l.b16 %v664
  %v736 = vunpack.c.l.b16 %v665
  %v737 = vunpack.c.l.b16 %v666
  %v738 = vunpack.c.l.b16 %v667
  %v739 = vunpack.c.l.b16 %v668
  %v740 = vunpack.c.l.b16 %v669
  %v741 = vunpack.c.l.b16 %v670
  %v742 = vunpack.c.l.b16 %v671
  %v743 = vunpack.c.l.b16 %v672
  %v744 = vunpack.c.l.b16 %v673
  %v745 = vunpack.c.l.b16 %v674
  %v746 = vunpack.c.l.b16 %v675
  %v747 = vunpack.c.l.b16 %v676
  %v748 = vunpack.c.l.b16 %v677
  %v749 = vunpack.c.l.b16 %v678
  %v750 = vunpack.c.l.b16 %v679
  %v751 = vunpack.c.l.b16 %v680
  %v752 = vunpack.c.l.b16 %v681
  %v753 = vunpack.c.l.b16 %v682
  %v754 = vunpack.c.l.b16 %v683
  %v755 = vpack.c.b16 %v724, %v723
  %v756 = vpack.c.b16 %v726, %v725
  %v757 = vpack.c.b16 %v728, %v727
  %v758 = vpack.c.b16 %v730, %v729
  %v759 = vpack.c.b16 %v732, %v731
  %v760 = vpack.c.b16 %v734, %v733
  %v761 = vpack.c.b16 %v736, %v735
  %v762 = vpack.c.b16 %v738, %v737
  %v763 = vpack.c.b16 %v740, %v739
  %v764 = vpack.c.b16 %v742, %v741
  %v765 = vpack.c.b16 %v744, %v743
  %v766 = vpack.c.b16 %v746, %v745
  %v767 = vpack.c.b16 %v748, %v747
  %v768 = vpack.c.b16 %v750, %v749
  %v769 = vpack.c.b16 %v752, %v751
  %v770 = vpack.c.b16 %v754, %v753
  %787 = vmatprep.subr.bf16.mxu0 0
  %788 = vmatpush1.bf16.msra.mxu0 %v755
  %789 = vmatprep.subr.bf16.mxu0 0
  %790 = vmatpush1.bf16.msra.mxu0 %v756
  %791 = vmatprep.subr.bf16.mxu0 0
  %792 = vmatpush1.bf16.msra.mxu0 %v757
  %793 = vmatprep.subr.bf16.mxu0 0
  %794 = vmatpush1.bf16.msra.mxu0 %v758
  %795 = vmatprep.subr.bf16.mxu0 0
  %796 = vmatpush1.bf16.msra.mxu0 %v759
  %797 = vmatprep.subr.bf16.mxu0 0
  %798 = vmatpush1.bf16.msra.mxu0 %v760
  %799 = vmatprep.subr.bf16.mxu0 0
  %800 = vmatpush1.bf16.msra.mxu0 %v761
  %801 = vmatprep.subr.bf16.mxu0 0
  %802 = vmatpush1.bf16.msra.mxu0 %v762
  %803 = vmatprep.subr.bf16.mxu0 0
  %804 = vmatpush1.bf16.msra.mxu0 %v763
  %805 = vmatprep.subr.bf16.mxu0 0
  %806 = vmatpush1.bf16.msra.mxu0 %v764
  %807 = vmatprep.subr.bf16.mxu0 0
  %808 = vmatpush1.bf16.msra.mxu0 %v765
  %809 = vmatprep.subr.bf16.mxu0 0
  %810 = vmatpush1.bf16.msra.mxu0 %v766
  %811 = vmatprep.subr.bf16.mxu0 0
  %812 = vmatpush1.bf16.msra.mxu0 %v767
  %813 = vmatprep.subr.bf16.mxu0 0
  %814 = vmatpush1.bf16.msra.mxu0 %v768
  %815 = vmatprep.subr.bf16.mxu0 0
  %816 = vmatpush1.bf16.msra.mxu0 %v769
  %817 = vmatprep.subr.bf16.mxu0 0
  %818 = vmatpush1.bf16.msra.mxu0 %v770
  %819 = vmatprep.mubr.bf16.mxu0 %v641
  %820 = vmatmul.mubr.bf16.gmra.mrb[0].mxu0 %v640
  %v821 = vpop.f32.mrb[0].mxu0
  %v822 = vadd.f32 %v689, %v821
  %v823 = vpop.f32.mrb[0].mxu0
  %v824 = vpop.f32.mrb[0].mxu0
  %v825 = vadd.f32 %v689, %v824
  %v826 = vpop.f32.mrb[0].mxu0
  %827 = vmatprep.mubr.bf16.mxu0 %v643
  %828 = vmatmul.mubr.bf16.gmra.mrb[0].mxu0 %v642
  %v829 = vpop.f32.mrb[0].mxu0
  %v830 = vadd.f32 %v689, %v829
  %v831 = vpop.f32.mrb[0].mxu0
  %v832 = vpop.f32.mrb[0].mxu0
  %v833 = vadd.f32 %v689, %v832
  %v834 = vpop.f32.mrb[0].mxu0
  %835 = vmatprep.mubr.bf16.mxu0 %v645
  %836 = vmatmul.mubr.bf16.gmra.mrb[0].mxu0 %v644
  %v837 = vpop.f32.mrb[0].mxu0
  %v838 = vadd.f32 %v689, %v837
  %v839 = vpop.f32.mrb[0].mxu0
  %v840 = vpop.f32.mrb[0].mxu0
  %v841 = vadd.f32 %v689, %v840
  %v842 = vpop.f32.mrb[0].mxu0
  %843 = vmatprep.mubr.bf16.mxu0 %v647
  %844 = vmatmul.mubr.bf16.gmra.mrb[0].mxu0 %v646
  %v845 = vpop.f32.mrb[0].mxu0
  %v846 = vadd.f32 %v689, %v845
  %v847 = vpop.f32.mrb[0].mxu0
  %v848 = vpop.f32.mrb[0].mxu0
  %v849 = vadd.f32 %v689, %v848
  %v850 = vpop.f32.mrb[0].mxu0
  %851 = vmatprep.mubr.bf16.mxu0 %v649
  %852 = vmatmul.mubr.bf16.gmra.mrb[0].mxu0 %v648
  %v853 = vpop.f32.mrb[0].mxu0
  %v854 = vadd.f32 %v689, %v853
  %v855 = vpop.f32.mrb[0].mxu0
  %v856 = vpop.f32.mrb[0].mxu0
  %v857 = vadd.f32 %v689, %v856
  %v858 = vpop.f32.mrb[0].mxu0
  %859 = vmatprep.mubr.bf16.mxu0 %v651
  %860 = vmatmul.mubr.bf16.gmra.mrb[0].mxu0 %v650
  %v861 = vpop.f32.mrb[0].mxu0
  %v862 = vadd.f32 %v689, %v861
  %v863 = vpop.f32.mrb[0].mxu0
  %v864 = vpop.f32.mrb[0].mxu0
  %v865 = vadd.f32 %v689, %v864
  %v866 = vpop.f32.mrb[0].mxu0
  %867 = vdwg.mxu0
  %v868 = vmax.f32 %v822, 0.0
  %v869 = vmax.f32 %v825, 0.0
  %v870 = vmax.f32 %v830, 0.0
  %v871 = vmax.f32 %v833, 0.0
  %v872 = vmax.f32 %v838, 0.0
  %v873 = vmax.f32 %v841, 0.0
  %v874 = vmax.f32 %v846, 0.0
  %v875 = vmax.f32 %v849, 0.0
  %v876 = vmax.f32 %v854, 0.0
  %v877 = vmax.f32 %v857, 0.0
  %v878 = vmax.f32 %v862, 0.0
  %v879 = vmax.f32 %v865, 0.0
  %v880 = vpack.c.bf16 %v869, %v868
  %v881 = vpack.c.bf16 %v871, %v870
  %v882 = vpack.c.bf16 %v873, %v872
  %v883 = vpack.c.bf16 %v875, %v874
  %v884 = vpack.c.bf16 %v877, %v876
  %v885 = vpack.c.bf16 %v879, %v878
  %v886 = vld [vmem:[%s7] sm:$0xf]
  %v887 = vld [vmem:[%s7 + $0x4] sm:$0xf]
  %v888 = vld [vmem:[%s7 + $0x8] sm:$0xf]
  %v889 = vld [vmem:[%s7 + $0xc] sm:$0xf]
  %v894 = vunpack.c.l.b16 %v886
  %v895 = vunpack.c.l.b16 %v887
  %v896 = vunpack.c.l.b16 %v888
  %v897 = vunpack.c.l.b16 %v889
  %v898 = vpack.c.b16 %v895, %v894
  %v899 = vpack.c.b16 %v897, %v896
  %vm902 = vcmask 261120
  %v904 = vsel %vm902, %v880, 0
  %v907 = vsel %vm902, %v881, 0
  %v910 = vsel %vm902, %v882, 0
  %v913 = vsel %vm902, %v883, 0
  %v916 = vsel %vm902, %v884, 0
  %v919 = vsel %vm902, %v885, 0
  %921 = vmatprep.subr.bf16.mxu0 0
  %922 = vmatpush1.bf16.msra.mxu0 %v898
  %923 = vmatprep.subr.bf16.mxu0 0
  %924 = vmatpush1.bf16.msra.mxu0 %v899
  %925 = vmatprep.subr.bf16.mxu0 0
  %926 = vmatpush1.bf16.msra.mxu0 0
  %927 = vmatprep.subr.bf16.mxu0 0
  %928 = vmatpush1.bf16.msra.mxu0 0
  %929 = vmatprep.subr.bf16.mxu0 0
  %930 = vmatpush1.bf16.msra.mxu0 0
  %931 = vmatprep.subr.bf16.mxu0 0
  %932 = vmatpush1.bf16.msra.mxu0 0
  %933 = vmatprep.subr.bf16.mxu0 0
  %934 = vmatpush1.bf16.msra.mxu0 0
  %935 = vmatprep.subr.bf16.mxu0 0
  %936 = vmatpush1.bf16.msra.mxu0 0
  %937 = vmatprep.subr.bf16.mxu0 0
  %938 = vmatpush1.bf16.msra.mxu0 0
  %939 = vmatprep.subr.bf16.mxu0 0
  %940 = vmatpush1.bf16.msra.mxu0 0
  %941 = vmatprep.subr.bf16.mxu0 0
  %942 = vmatpush1.bf16.msra.mxu0 0
  %943 = vmatprep.subr.bf16.mxu0 0
  %944 = vmatpush1.bf16.msra.mxu0 0
  %945 = vmatprep.subr.bf16.mxu0 0
  %946 = vmatpush1.bf16.msra.mxu0 0
  %947 = vmatprep.subr.bf16.mxu0 0
  %948 = vmatpush1.bf16.msra.mxu0 0
  %949 = vmatprep.subr.bf16.mxu0 0
  %950 = vmatpush1.bf16.msra.mxu0 0
  %951 = vmatprep.subr.bf16.mxu0 0
  %952 = vmatpush1.bf16.msra.mxu0 0
  %953 = vmatprep.mubr.bf16.mxu0 0
  %954 = vmatmul.mubr.bf16.gmra.mrb[0].mxu0 %v904
  %v955 = vpop.f32.mrb[0].mxu0
  %v956 = vadd.f32 0.0, %v955
  %v957 = vpop.f32.mrb[0].mxu0
  %v958 = vpop.f32.mrb[0].mxu0
  %v959 = vadd.f32 0.0, %v958
  %v960 = vpop.f32.mrb[0].mxu0
  %961 = vmatprep.mubr.bf16.mxu0 0
  %962 = vmatmul.mubr.bf16.gmra.mrb[0].mxu0 %v907
  %v963 = vpop.f32.mrb[0].mxu0
  %v964 = vadd.f32 0.0, %v963
  %v965 = vpop.f32.mrb[0].mxu0
  %v966 = vpop.f32.mrb[0].mxu0
  %v967 = vadd.f32 0.0, %v966
  %v968 = vpop.f32.mrb[0].mxu0
  %969 = vmatprep.mubr.bf16.mxu0 0
  %970 = vmatmul.mubr.bf16.gmra.mrb[0].mxu0 %v910
  %v971 = vpop.f32.mrb[0].mxu0
  %v972 = vadd.f32 0.0, %v971
  %v973 = vpop.f32.mrb[0].mxu0
  %v974 = vpop.f32.mrb[0].mxu0
  %v975 = vadd.f32 0.0, %v974
  %v976 = vpop.f32.mrb[0].mxu0
  %977 = vmatprep.mubr.bf16.mxu0 0
  %978 = vmatmul.mubr.bf16.gmra.mrb[0].mxu0 %v913
  %v979 = vpop.f32.mrb[0].mxu0
  %v980 = vadd.f32 0.0, %v979
  %v981 = vpop.f32.mrb[0].mxu0
  %v982 = vpop.f32.mrb[0].mxu0
  %v983 = vadd.f32 0.0, %v982
  %v984 = vpop.f32.mrb[0].mxu0
  %985 = vmatprep.mubr.bf16.mxu0 0
  %986 = vmatmul.mubr.bf16.gmra.mrb[0].mxu0 %v916
  %v987 = vpop.f32.mrb[0].mxu0
  %v988 = vadd.f32 0.0, %v987
  %v989 = vpop.f32.mrb[0].mxu0
  %v990 = vpop.f32.mrb[0].mxu0
  %v991 = vadd.f32 0.0, %v990
  %v992 = vpop.f32.mrb[0].mxu0
  %993 = vmatprep.mubr.bf16.mxu0 0
  %994 = vmatmul.mubr.bf16.gmra.mrb[0].mxu0 %v919
  %v995 = vpop.f32.mrb[0].mxu0
  %v996 = vadd.f32 0.0, %v995
  %v997 = vpop.f32.mrb[0].mxu0
  %v998 = vpop.f32.mrb[0].mxu0
  %v999 = vadd.f32 0.0, %v998
  %v1000 = vpop.f32.mrb[0].mxu0
  %1001 = vdwg.mxu0
  %v1002 = vld [vmem:[%s8] sm:$0x1]
  %v1004 = vlaneseq
  %v1005 = vshrl.u32 %v1004, 7
  %v1006 = vsub.s32 0, %v1005
  %v1007 = vrot.slane %v1002, %v1006
  %v1009 = vadd.f32 %v956, %v1007
  %v1010 = vadd.f32 %v959, %v1007
  %v1011 = vadd.f32 %v964, %v1007
  %v1012 = vadd.f32 %v967, %v1007
  %v1013 = vadd.f32 %v972, %v1007
  %v1014 = vadd.f32 %v975, %v1007
  %v1015 = vadd.f32 %v980, %v1007
  %v1016 = vadd.f32 %v983, %v1007
  %v1017 = vadd.f32 %v988, %v1007
  %v1018 = vadd.f32 %v991, %v1007
  %v1019 = vadd.f32 %v996, %v1007
  %v1020 = vadd.f32 %v999, %v1007
  %v1021 = vmax.f32 %v1009, 0.0
  %v1022 = vmax.f32 %v1010, 0.0
  %v1023 = vmax.f32 %v1011, 0.0
  %v1024 = vmax.f32 %v1012, 0.0
  %v1025 = vmax.f32 %v1013, 0.0
  %v1026 = vmax.f32 %v1014, 0.0
  %v1027 = vmax.f32 %v1015, 0.0
  %v1028 = vmax.f32 %v1016, 0.0
  %v1029 = vmax.f32 %v1017, 0.0
  %v1030 = vmax.f32 %v1018, 0.0
  %v1031 = vmax.f32 %v1019, 0.0
  %v1032 = vmax.f32 %v1020, 0.0
  %v1033 = vpack.c.bf16 %v1022, %v1021
  %v1034 = vpack.c.bf16 %v1024, %v1023
  %v1035 = vpack.c.bf16 %v1026, %v1025
  %v1036 = vpack.c.bf16 %v1028, %v1027
  %v1037 = vpack.c.bf16 %v1030, %v1029
  %v1038 = vpack.c.bf16 %v1032, %v1031
  %v1039 = vld [vmem:[%s9] sm:$0xf]
  %v1040 = vld [vmem:[%s9 + $0x4] sm:$0xf]
  %v1041 = vld [vmem:[%s9 + $0x8] sm:$0xf]
  %v1042 = vld [vmem:[%s9 + $0xc] sm:$0xf]
  %v1043 = vld [vmem:[%s10] sm:$0x1]
  %v1045 = vlaneseq
  %v1046 = vshrl.u32 %v1045, 7
  %v1047 = vsub.s32 0, %v1046
  %v1048 = vrot.slane %v1043, %v1047
  %v1054 = vunpack.c.l.b16 %v1039
  %v1055 = vunpack.c.l.b16 %v1040
  %v1056 = vunpack.c.l.b16 %v1041
  %v1057 = vunpack.c.l.b16 %v1042
  %v1058 = vpack.c.b16 %v1055, %v1054
  %v1059 = vpack.c.b16 %v1057, %v1056
  %v1063 = vsel %vm902, %v1033, 0
  %v1066 = vsel %vm902, %v1034, 0
  %v1069 = vsel %vm902, %v1035, 0
  %v1072 = vsel %vm902, %v1036, 0
  %v1075 = vsel %vm902, %v1037, 0
  %v1078 = vsel %vm902, %v1038, 0
  %1080 = vmatprep.subr.bf16.mxu0 0
  %1081 = vmatpush1.bf16.msra.mxu0 %v1058
  %1082 = vmatprep.subr.bf16.mxu0 0
  %1083 = vmatpush1.bf16.msra.mxu0 %v1059
  %1084 = vmatprep.subr.bf16.mxu0 0
  %1085 = vmatpush1.bf16.msra.mxu0 0
  %1086 = vmatprep.subr.bf16.mxu0 0
  %1087 = vmatpush1.bf16.msra.mxu0 0
  %1088 = vmatprep.subr.bf16.mxu0 0
  %1089 = vmatpush1.bf16.msra.mxu0 0
  %1090 = vmatprep.subr.bf16.mxu0 0
  %1091 = vmatpush1.bf16.msra.mxu0 0
  %1092 = vmatprep.subr.bf16.mxu0 0
  %1093 = vmatpush1.bf16.msra.mxu0 0
  %1094 = vmatprep.subr.bf16.mxu0 0
  %1095 = vmatpush1.bf16.msra.mxu0 0
  %1096 = vmatprep.subr.bf16.mxu0 0
  %1097 = vmatpush1.bf16.msra.mxu0 0
  %1098 = vmatprep.subr.bf16.mxu0 0
  %1099 = vmatpush1.bf16.msra.mxu0 0
  %1100 = vmatprep.subr.bf16.mxu0 0
  %1101 = vmatpush1.bf16.msra.mxu0 0
  %1102 = vmatprep.subr.bf16.mxu0 0
  %1103 = vmatpush1.bf16.msra.mxu0 0
  %1104 = vmatprep.subr.bf16.mxu0 0
  %1105 = vmatpush1.bf16.msra.mxu0 0
  %1106 = vmatprep.subr.bf16.mxu0 0
  %1107 = vmatpush1.bf16.msra.mxu0 0
  %1108 = vmatprep.subr.bf16.mxu0 0
  %1109 = vmatpush1.bf16.msra.mxu0 0
  %1110 = vmatprep.subr.bf16.mxu0 0
  %1111 = vmatpush1.bf16.msra.mxu0 0
  %1112 = vmatprep.mubr.bf16.mxu0 0
  %1113 = vmatmul.mubr.bf16.gmra.mrb[0].mxu0 %v1063
  %v1114 = vpop.f32.mrb[0].mxu0
  %v1115 = vadd.f32 %v1048, %v1114
  %v1116 = vpop.f32.mrb[0].mxu0
  %v1117 = vpop.f32.mrb[0].mxu0
  %v1118 = vadd.f32 %v1048, %v1117
  %v1119 = vpop.f32.mrb[0].mxu0
  %1120 = vmatprep.mubr.bf16.mxu0 0
  %1121 = vmatmul.mubr.bf16.gmra.mrb[0].mxu0 %v1066
  %v1122 = vpop.f32.mrb[0].mxu0
  %v1123 = vadd.f32 %v1048, %v1122
  %v1124 = vpop.f32.mrb[0].mxu0
  %v1125 = vpop.f32.mrb[0].mxu0
  %v1126 = vadd.f32 %v1048, %v1125
  %v1127 = vpop.f32.mrb[0].mxu0
  %1128 = vmatprep.mubr.bf16.mxu0 0
  %1129 = vmatmul.mubr.bf16.gmra.mrb[0].mxu0 %v1069
  %v1130 = vpop.f32.mrb[0].mxu0
  %v1131 = vadd.f32 %v1048, %v1130
  %v1132 = vpop.f32.mrb[0].mxu0
  %v1133 = vpop.f32.mrb[0].mxu0
  %v1134 = vadd.f32 %v1048, %v1133
  %v1135 = vpop.f32.mrb[0].mxu0
  %1136 = vmatprep.mubr.bf16.mxu0 0
  %1137 = vmatmul.mubr.bf16.gmra.mrb[0].mxu0 %v1072
  %v1138 = vpop.f32.mrb[0].mxu0
  %v1139 = vadd.f32 %v1048, %v1138
  %v1140 = vpop.f32.mrb[0].mxu0
  %v1141 = vpop.f32.mrb[0].mxu0
  %v1142 = vadd.f32 %v1048, %v1141
  %v1143 = vpop.f32.mrb[0].mxu0
  %1144 = vmatprep.mubr.bf16.mxu0 0
  %1145 = vmatmul.mubr.bf16.gmra.mrb[0].mxu0 %v1075
  %v1146 = vpop.f32.mrb[0].mxu0
  %v1147 = vadd.f32 %v1048, %v1146
  %v1148 = vpop.f32.mrb[0].mxu0
  %v1149 = vpop.f32.mrb[0].mxu0
  %v1150 = vadd.f32 %v1048, %v1149
  %v1151 = vpop.f32.mrb[0].mxu0
  %1152 = vmatprep.mubr.bf16.mxu0 0
  %1153 = vmatmul.mubr.bf16.gmra.mrb[0].mxu0 %v1078
  %v1154 = vpop.f32.mrb[0].mxu0
  %v1155 = vadd.f32 %v1048, %v1154
  %v1156 = vpop.f32.mrb[0].mxu0
  %v1157 = vpop.f32.mrb[0].mxu0
  %v1158 = vadd.f32 %v1048, %v1157
  %v1159 = vpop.f32.mrb[0].mxu0
  %1160 = vdwg.mxu0
  %v1161 = vmax.f32 %v1115, 0.0
  %v1162 = vmax.f32 %v1118, 0.0
  %v1163 = vmax.f32 %v1123, 0.0
  %v1164 = vmax.f32 %v1126, 0.0
  %v1165 = vmax.f32 %v1131, 0.0
  %v1166 = vmax.f32 %v1134, 0.0
  %v1167 = vmax.f32 %v1139, 0.0
  %v1168 = vmax.f32 %v1142, 0.0
  %v1169 = vmax.f32 %v1147, 0.0
  %v1170 = vmax.f32 %v1150, 0.0
  %v1171 = vmax.f32 %v1155, 0.0
  %v1172 = vmax.f32 %v1158, 0.0
  %v1173 = vadd.f32 %v1161, %v1163
  %v1174 = vadd.f32 %v1162, %v1164
  %v1175 = vadd.f32 %v1173, %v1165
  %v1176 = vadd.f32 %v1174, %v1166
  %v1177 = vadd.f32 %v1175, %v1167
  %v1178 = vadd.f32 %v1176, %v1168
  %v1179 = vadd.f32 %v1177, %v1169
  %v1180 = vadd.f32 %v1178, %v1170
  %v1181 = vadd.f32 %v1179, %v1171
  %v1182 = vadd.f32 %v1180, %v1172
  %v1183 = vpack.c.bf16 %v1182, %v1181
  %v1184 = vld [vmem:[%s11] sm:$0xf]
  %v1185 = vld [vmem:[%s11 + $0x4] sm:$0xf]
  %v1186 = vld [vmem:[%s11 + $0x8] sm:$0xf]
  %v1187 = vld [vmem:[%s11 + $0xc] sm:$0xf]
  %v1188 = vld [vmem:[%s12] sm:$0x1]
  %v1190 = vlaneseq
  %v1191 = vshrl.u32 %v1190, 7
  %v1192 = vsub.s32 0, %v1191
  %v1193 = vrot.slane %v1188, %v1192
  %v1199 = vunpack.c.l.b16 %v1184
  %v1200 = vunpack.c.l.b16 %v1185
  %v1201 = vunpack.c.l.b16 %v1186
  %v1202 = vunpack.c.l.b16 %v1187
  %v1203 = vpack.c.b16 %v1200, %v1199
  %v1204 = vpack.c.b16 %v1202, %v1201
  %v1208 = vsel %vm902, %v1183, 0
  %1210 = vmatprep.subr.bf16.mxu0 0
  %1211 = vmatpush1.bf16.msra.mxu0 %v1203
  %1212 = vmatprep.subr.bf16.mxu0 0
  %1213 = vmatpush1.bf16.msra.mxu0 %v1204
  %1214 = vmatprep.subr.bf16.mxu0 0
  %1215 = vmatpush1.bf16.msra.mxu0 0
  %1216 = vmatprep.subr.bf16.mxu0 0
  %1217 = vmatpush1.bf16.msra.mxu0 0
  %1218 = vmatprep.subr.bf16.mxu0 0
  %1219 = vmatpush1.bf16.msra.mxu0 0
  %1220 = vmatprep.subr.bf16.mxu0 0
  %1221 = vmatpush1.bf16.msra.mxu0 0
  %1222 = vmatprep.subr.bf16.mxu0 0
  %1223 = vmatpush1.bf16.msra.mxu0 0
  %1224 = vmatprep.subr.bf16.mxu0 0
  %1225 = vmatpush1.bf16.msra.mxu0 0
  %1226 = vmatprep.subr.bf16.mxu0 0
  %1227 = vmatpush1.bf16.msra.mxu0 0
  %1228 = vmatprep.subr.bf16.mxu0 0
  %1229 = vmatpush1.bf16.msra.mxu0 0
  %1230 = vmatprep.subr.bf16.mxu0 0
  %1231 = vmatpush1.bf16.msra.mxu0 0
  %1232 = vmatprep.subr.bf16.mxu0 0
  %1233 = vmatpush1.bf16.msra.mxu0 0
  %1234 = vmatprep.subr.bf16.mxu0 0
  %1235 = vmatpush1.bf16.msra.mxu0 0
  %1236 = vmatprep.subr.bf16.mxu0 0
  %1237 = vmatpush1.bf16.msra.mxu0 0
  %1238 = vmatprep.subr.bf16.mxu0 0
  %1239 = vmatpush1.bf16.msra.mxu0 0
  %1240 = vmatprep.subr.bf16.mxu0 0
  %1241 = vmatpush1.bf16.msra.mxu0 0
  %1242 = vmatprep.mubr.bf16.mxu0 0
  %1243 = vmatmul.mubr.bf16.gmra.mrb[0].mxu0 %v1208
  %v1244 = vpop.f32.mrb[0].mxu0
  %v1245 = vadd.f32 %v1193, %v1244
  %v1246 = vpop.f32.mrb[0].mxu0
  %v1247 = vpop.f32.mrb[0].mxu0
  %v1248 = vadd.f32 %v1193, %v1247
  %v1249 = vpop.f32.mrb[0].mxu0
  %1250 = vdwg.mxu0
  %v1251 = vmax.f32 %v1245, 0.0
  %v1252 = vmax.f32 %v1248, 0.0
  %v1253 = vpack.c.bf16 %v1252, %v1251
  %v1254 = vld [vmem:[%s13] sm:$0xf]
  %v1255 = vld [vmem:[%s13 + $0x4] sm:$0xf]
  %v1256 = vld [vmem:[%s13 + $0x8] sm:$0xf]
  %v1257 = vld [vmem:[%s13 + $0xc] sm:$0xf]
  %v1258 = vld [vmem:[%s14] sm:$0x1]
  %v1260 = vlaneseq
  %v1261 = vshrl.u32 %v1260, 7
  %v1262 = vsub.s32 0, %v1261
  %v1263 = vrot.slane %v1258, %v1262
  %v1269 = vunpack.c.l.b16 %v1254
  %v1270 = vunpack.c.l.b16 %v1255
  %v1271 = vunpack.c.l.b16 %v1256
  %v1272 = vunpack.c.l.b16 %v1257
  %v1273 = vpack.c.b16 %v1270, %v1269
  %v1274 = vpack.c.b16 %v1272, %v1271
  %v1278 = vsel %vm902, %v1253, 0
  %1280 = vmatprep.subr.bf16.mxu0 0
  %1281 = vmatpush1.bf16.msra.mxu0 %v1273
  %1282 = vmatprep.subr.bf16.mxu0 0
  %1283 = vmatpush1.bf16.msra.mxu0 %v1274
  %1284 = vmatprep.subr.bf16.mxu0 0
  %1285 = vmatpush1.bf16.msra.mxu0 0
  %1286 = vmatprep.subr.bf16.mxu0 0
  %1287 = vmatpush1.bf16.msra.mxu0 0
  %1288 = vmatprep.subr.bf16.mxu0 0
  %1289 = vmatpush1.bf16.msra.mxu0 0
  %1290 = vmatprep.subr.bf16.mxu0 0
  %1291 = vmatpush1.bf16.msra.mxu0 0
  %1292 = vmatprep.subr.bf16.mxu0 0
  %1293 = vmatpush1.bf16.msra.mxu0 0
  %1294 = vmatprep.subr.bf16.mxu0 0
  %1295 = vmatpush1.bf16.msra.mxu0 0
  %1296 = vmatprep.subr.bf16.mxu0 0
  %1297 = vmatpush1.bf16.msra.mxu0 0
  %1298 = vmatprep.subr.bf16.mxu0 0
  %1299 = vmatpush1.bf16.msra.mxu0 0
  %1300 = vmatprep.subr.bf16.mxu0 0
  %1301 = vmatpush1.bf16.msra.mxu0 0
  %1302 = vmatprep.subr.bf16.mxu0 0
  %1303 = vmatpush1.bf16.msra.mxu0 0
  %1304 = vmatprep.subr.bf16.mxu0 0
  %1305 = vmatpush1.bf16.msra.mxu0 0
  %1306 = vmatprep.subr.bf16.mxu0 0
  %1307 = vmatpush1.bf16.msra.mxu0 0
  %1308 = vmatprep.subr.bf16.mxu0 0
  %1309 = vmatpush1.bf16.msra.mxu0 0
  %1310 = vmatprep.subr.bf16.mxu0 0
  %1311 = vmatpush1.bf16.msra.mxu0 0
  %1312 = vmatprep.mubr.bf16.mxu0 0
  %1313 = vmatmul.mubr.bf16.gmra.mrb[0].mxu0 %v1278
  %v1314 = vpop.f32.mrb[0].mxu0
  %v1315 = vadd.f32 %v1263, %v1314
  %v1316 = vpop.f32.mrb[0].mxu0
  %v1317 = vpop.f32.mrb[0].mxu0
  %v1318 = vadd.f32 %v1263, %v1317
  %v1319 = vpop.f32.mrb[0].mxu0
  %1320 = vdwg.mxu0
  %v1321 = vmax.f32 %v1315, 0.0
  %v1322 = vmax.f32 %v1318, 0.0
  %v1323 = vpack.c.bf16 %v1322, %v1321
  %v1324 = vld [vmem:[%s15] sm:$0xf]
  %v1325 = vld [vmem:[%s15 + $0x4] sm:$0xf]
  %v1326 = vld [vmem:[%s15 + $0x8] sm:$0xf]
  %v1327 = vld [vmem:[%s15 + $0xc] sm:$0xf]
  %v1332 = vunpack.c.l.b16 %v1324
  %v1333 = vunpack.c.l.b16 %v1325
  %v1334 = vunpack.c.l.b16 %v1326
  %v1335 = vunpack.c.l.b16 %v1327
  %v1336 = vpack.c.b16 %v1333, %v1332
  %v1337 = vpack.c.b16 %v1335, %v1334
  %v1341 = vsel %vm902, %v1323, 0
  %1343 = vmatprep.subr.bf16.mxu0 0
  %1344 = vmatpush1.bf16.msra.mxu0 %v1336
  %1345 = vmatprep.subr.bf16.mxu0 0
  %1346 = vmatpush1.bf16.msra.mxu0 %v1337
  %1347 = vmatprep.subr.bf16.mxu0 0
  %1348 = vmatpush1.bf16.msra.mxu0 0
  %1349 = vmatprep.subr.bf16.mxu0 0
  %1350 = vmatpush1.bf16.msra.mxu0 0
  %1351 = vmatprep.subr.bf16.mxu0 0
  %1352 = vmatpush1.bf16.msra.mxu0 0
  %1353 = vmatprep.subr.bf16.mxu0 0
  %1354 = vmatpush1.bf16.msra.mxu0 0
  %1355 = vmatprep.subr.bf16.mxu0 0
  %1356 = vmatpush1.bf16.msra.mxu0 0
  %1357 = vmatprep.subr.bf16.mxu0 0
  %1358 = vmatpush1.bf16.msra.mxu0 0
  %1359 = vmatprep.subr.bf16.mxu0 0
  %1360 = vmatpush1.bf16.msra.mxu0 0
  %1361 = vmatprep.subr.bf16.mxu0 0
  %1362 = vmatpush1.bf16.msra.mxu0 0
  %1363 = vmatprep.subr.bf16.mxu0 0
  %1364 = vmatpush1.bf16.msra.mxu0 0
  %1365 = vmatprep.subr.bf16.mxu0 0
  %1366 = vmatpush1.bf16.msra.mxu0 0
  %1367 = vmatprep.subr.bf16.mxu0 0
  %1368 = vmatpush1.bf16.msra.mxu0 0
  %1369 = vmatprep.subr.bf16.mxu0 0
  %1370 = vmatpush1.bf16.msra.mxu0 0
  %1371 = vmatprep.subr.bf16.mxu0 0
  %1372 = vmatpush1.bf16.msra.mxu0 0
  %1373 = vmatprep.subr.bf16.mxu0 0
  %1374 = vmatpush1.bf16.msra.mxu0 0
  %1375 = vmatprep.mubr.bf16.mxu0 0
  %1376 = vmatmul.mubr.bf16.gmra.mrb[0].mxu0 %v1341
  %v1377 = vpop.f32.mrb[0].mxu0
  %v1378 = vadd.f32 0.0, %v1377
  %v1379 = vpop.f32.mrb[0].mxu0
  %v1380 = vpop.f32.mrb[0].mxu0
  %v1381 = vadd.f32 0.0, %v1380
  %v1382 = vpop.f32.mrb[0].mxu0
  %1383 = vdwg.mxu0
  %1386 = vrot.lane.b32.xlu0 %v1378, 32
  %v1387 = vpop.permute.xlu0 %1386
  %1388 = vrot.lane.b32.xlu0 %v1381, 32
  %v1389 = vpop.permute.xlu0 %1388
  %v1392 = vadd.f32 %v956, %v1387
  %v1393 = vadd.f32 %v959, %v1389
  %v1394 = vadd.f32 %v964, %v1387
  %v1395 = vadd.f32 %v967, %v1389
  %v1396 = vadd.f32 %v972, %v1387
  %v1397 = vadd.f32 %v975, %v1389
  %v1398 = vadd.f32 %v980, %v1387
  %v1399 = vadd.f32 %v983, %v1389
  %v1400 = vadd.f32 %v988, %v1387
  %v1401 = vadd.f32 %v991, %v1389
  %v1402 = vadd.f32 %v996, %v1387
  %v1403 = vadd.f32 %v999, %v1389
  %v1404 = vld [vmem:[%s16] sm:$0x1]
  %v1406 = vlaneseq
  %v1407 = vshrl.u32 %v1406, 7
  %v1408 = vsub.s32 0, %v1407
  %v1409 = vrot.slane %v1404, %v1408
  %1410 = vrot.lane.b32.xlu0 %v1409, 32
  %v1411 = vpop.permute.xlu0 %1410
  %v1413 = vadd.f32 %v1392, %v1411
  %v1414 = vadd.f32 %v1393, %v1411
  %v1415 = vadd.f32 %v1394, %v1411
  %v1416 = vadd.f32 %v1395, %v1411
  %v1417 = vadd.f32 %v1396, %v1411
  %v1418 = vadd.f32 %v1397, %v1411
  %v1419 = vadd.f32 %v1398, %v1411
  %v1420 = vadd.f32 %v1399, %v1411
  %v1421 = vadd.f32 %v1400, %v1411
  %v1422 = vadd.f32 %v1401, %v1411
  %v1423 = vadd.f32 %v1402, %v1411
  %v1424 = vadd.f32 %v1403, %v1411
  %v1425 = vmax.f32 %v1413, 0.0
  %v1426 = vmax.f32 %v1414, 0.0
  %v1427 = vmax.f32 %v1415, 0.0
  %v1428 = vmax.f32 %v1416, 0.0
  %v1429 = vmax.f32 %v1417, 0.0
  %v1430 = vmax.f32 %v1418, 0.0
  %v1431 = vmax.f32 %v1419, 0.0
  %v1432 = vmax.f32 %v1420, 0.0
  %v1433 = vmax.f32 %v1421, 0.0
  %v1434 = vmax.f32 %v1422, 0.0
  %v1435 = vmax.f32 %v1423, 0.0
  %v1436 = vmax.f32 %v1424, 0.0
  %v1437 = vpack.c.bf16 %v1426, %v1425
  %v1438 = vpack.c.bf16 %v1428, %v1427
  %v1439 = vpack.c.bf16 %v1430, %v1429
  %v1440 = vpack.c.bf16 %v1432, %v1431
  %v1441 = vpack.c.bf16 %v1434, %v1433
  %v1442 = vpack.c.bf16 %v1436, %v1435
  %v1443 = vld [vmem:[%s17] sm:$0xf]
  %v1444 = vld [vmem:[%s17 + $0x4] sm:$0xf]
  %v1445 = vld [vmem:[%s17 + $0x8] sm:$0xf]
  %v1446 = vld [vmem:[%s17 + $0xc] sm:$0xf]
  %v1447 = vld [vmem:[%s17 + $0x10] sm:$0xf]
  %v1448 = vld [vmem:[%s17 + $0x14] sm:$0xf]
  %v1449 = vld [vmem:[%s17 + $0x18] sm:$0xf]
  %v1450 = vld [vmem:[%s17 + $0x1c] sm:$0xf]
  %v1451 = vld [vmem:[%s18] sm:$0x1]
  %v1453 = vlaneseq
  %v1454 = vshrl.u32 %v1453, 7
  %v1455 = vsub.s32 0, %v1454
  %v1456 = vrot.slane %v1451, %v1455
  %1464 = vrot.lane.b32.xlu0 %v1437, 96
  %v1465 = vpop.permute.xlu0 %1464
  %1466 = vrot.lane.b32.xlu0 %v1438, 96
  %v1467 = vpop.permute.xlu0 %1466
  %1468 = vrot.lane.b32.xlu0 %v1439, 96
  %v1469 = vpop.permute.xlu0 %1468
  %1470 = vrot.lane.b32.xlu0 %v1440, 96
  %v1471 = vpop.permute.xlu0 %1470
  %1472 = vrot.lane.b32.xlu0 %v1441, 96
  %v1473 = vpop.permute.xlu0 %1472
  %1474 = vrot.lane.b32.xlu0 %v1442, 96
  %v1475 = vpop.permute.xlu0 %1474
  %v1484 = vunpack.c.l.b16 %v1443
  %v1485 = vunpack.c.l.b16 %v1444
  %v1486 = vunpack.c.l.b16 %v1445
  %v1487 = vunpack.c.l.b16 %v1446
  %v1488 = vunpack.c.l.b16 %v1447
  %v1489 = vunpack.c.l.b16 %v1448
  %v1490 = vunpack.c.l.b16 %v1449
  %v1491 = vunpack.c.l.b16 %v1450
  %v1492 = vpack.c.b16 %v1485, %v1484
  %v1493 = vpack.c.b16 %v1487, %v1486
  %v1494 = vpack.c.b16 %v1489, %v1488
  %v1495 = vpack.c.b16 %v1491, %v1490
  %v1501 = vsel %vm171, %v1465, 0
  %v1504 = vsel %vm171, %v1467, 0
  %v1507 = vsel %vm171, %v1469, 0
  %v1510 = vsel %vm171, %v1471, 0
  %v1513 = vsel %vm171, %v1473, 0
  %v1516 = vsel %vm171, %v1475, 0
  %1518 = vmatprep.subr.bf16.mxu0 0
  %1519 = vmatpush1.bf16.msra.mxu0 %v1492
  %1520 = vmatprep.subr.bf16.mxu0 0
  %1521 = vmatpush1.bf16.msra.mxu0 %v1493
  %1522 = vmatprep.subr.bf16.mxu0 0
  %1523 = vmatpush1.bf16.msra.mxu0 %v1494
  %1524 = vmatprep.subr.bf16.mxu0 0
  %1525 = vmatpush1.bf16.msra.mxu0 %v1495
  %1526 = vmatprep.subr.bf16.mxu0 0
  %1527 = vmatpush1.bf16.msra.mxu0 0
  %1528 = vmatprep.subr.bf16.mxu0 0
  %1529 = vmatpush1.bf16.msra.mxu0 0
  %1530 = vmatprep.subr.bf16.mxu0 0
  %1531 = vmatpush1.bf16.msra.mxu0 0
  %1532 = vmatprep.subr.bf16.mxu0 0
  %1533 = vmatpush1.bf16.msra.mxu0 0
  %1534 = vmatprep.subr.bf16.mxu0 0
  %1535 = vmatpush1.bf16.msra.mxu0 0
  %1536 = vmatprep.subr.bf16.mxu0 0
  %1537 = vmatpush1.bf16.msra.mxu0 0
  %1538 = vmatprep.subr.bf16.mxu0 0
  %1539 = vmatpush1.bf16.msra.mxu0 0
  %1540 = vmatprep.subr.bf16.mxu0 0
  %1541 = vmatpush1.bf16.msra.mxu0 0
  %1542 = vmatprep.subr.bf16.mxu0 0
  %1543 = vmatpush1.bf16.msra.mxu0 0
  %1544 = vmatprep.subr.bf16.mxu0 0
  %1545 = vmatpush1.bf16.msra.mxu0 0
  %1546 = vmatprep.subr.bf16.mxu0 0
  %1547 = vmatpush1.bf16.msra.mxu0 0
  %1548 = vmatprep.subr.bf16.mxu0 0
  %1549 = vmatpush1.bf16.msra.mxu0 0
  %1550 = vmatprep.mubr.bf16.mxu0 0
  %1551 = vmatmul.mubr.bf16.gmra.mrb[0].mxu0 %v1501
  %v1552 = vpop.f32.mrb[0].mxu0
  %v1553 = vadd.f32 %v1456, %v1552
  %v1554 = vpop.f32.mrb[0].mxu0
  %v1555 = vpop.f32.mrb[0].mxu0
  %v1556 = vadd.f32 %v1456, %v1555
  %v1557 = vpop.f32.mrb[0].mxu0
  %1558 = vmatprep.mubr.bf16.mxu0 0
  %1559 = vmatmul.mubr.bf16.gmra.mrb[0].mxu0 %v1504
  %v1560 = vpop.f32.mrb[0].mxu0
  %v1561 = vadd.f32 %v1456, %v1560
  %v1562 = vpop.f32.mrb[0].mxu0
  %v1563 = vpop.f32.mrb[0].mxu0
  %v1564 = vadd.f32 %v1456, %v1563
  %v1565 = vpop.f32.mrb[0].mxu0
  %1566 = vmatprep.mubr.bf16.mxu0 0
  %1567 = vmatmul.mubr.bf16.gmra.mrb[0].mxu0 %v1507
  %v1568 = vpop.f32.mrb[0].mxu0
  %v1569 = vadd.f32 %v1456, %v1568
  %v1570 = vpop.f32.mrb[0].mxu0
  %v1571 = vpop.f32.mrb[0].mxu0
  %v1572 = vadd.f32 %v1456, %v1571
  %v1573 = vpop.f32.mrb[0].mxu0
  %1574 = vmatprep.mubr.bf16.mxu0 0
  %1575 = vmatmul.mubr.bf16.gmra.mrb[0].mxu0 %v1510
  %v1576 = vpop.f32.mrb[0].mxu0
  %v1577 = vadd.f32 %v1456, %v1576
  %v1578 = vpop.f32.mrb[0].mxu0
  %v1579 = vpop.f32.mrb[0].mxu0
  %v1580 = vadd.f32 %v1456, %v1579
  %v1581 = vpop.f32.mrb[0].mxu0
  %1582 = vmatprep.mubr.bf16.mxu0 0
  %1583 = vmatmul.mubr.bf16.gmra.mrb[0].mxu0 %v1513
  %v1584 = vpop.f32.mrb[0].mxu0
  %v1585 = vadd.f32 %v1456, %v1584
  %v1586 = vpop.f32.mrb[0].mxu0
  %v1587 = vpop.f32.mrb[0].mxu0
  %v1588 = vadd.f32 %v1456, %v1587
  %v1589 = vpop.f32.mrb[0].mxu0
  %1590 = vmatprep.mubr.bf16.mxu0 0
  %1591 = vmatmul.mubr.bf16.gmra.mrb[0].mxu0 %v1516
  %v1592 = vpop.f32.mrb[0].mxu0
  %v1593 = vadd.f32 %v1456, %v1592
  %v1594 = vpop.f32.mrb[0].mxu0
  %v1595 = vpop.f32.mrb[0].mxu0
  %v1596 = vadd.f32 %v1456, %v1595
  %v1597 = vpop.f32.mrb[0].mxu0
  %1598 = vdwg.mxu0
  %v1599 = vmax.f32 %v1553, 0.0
  %v1600 = vmax.f32 %v1556, 0.0
  %v1601 = vmax.f32 %v1561, 0.0
  %v1602 = vmax.f32 %v1564, 0.0
  %v1603 = vmax.f32 %v1569, 0.0
  %v1604 = vmax.f32 %v1572, 0.0
  %v1605 = vmax.f32 %v1577, 0.0
  %v1606 = vmax.f32 %v1580, 0.0
  %v1607 = vmax.f32 %v1585, 0.0
  %v1608 = vmax.f32 %v1588, 0.0
  %v1609 = vmax.f32 %v1593, 0.0
  %v1610 = vmax.f32 %v1596, 0.0
  %v1611 = vpack.c.bf16 %v1600, %v1599
  %v1612 = vpack.c.bf16 %v1602, %v1601
  %v1613 = vpack.c.bf16 %v1604, %v1603
  %v1614 = vpack.c.bf16 %v1606, %v1605
  %v1615 = vpack.c.bf16 %v1608, %v1607
  %v1616 = vpack.c.bf16 %v1610, %v1609
  %v1617 = vld [vmem:[%s19] sm:$0xf]
  %v1618 = vld [vmem:[%s19 + $0x4] sm:$0xf]
  %v1619 = vld [vmem:[%s19 + $0x8] sm:$0xf]
  %v1620 = vld [vmem:[%s19 + $0xc] sm:$0xf]
  %v1621 = vld [vmem:[%s19 + $0x10] sm:$0xf]
  %v1622 = vld [vmem:[%s19 + $0x14] sm:$0xf]
  %v1623 = vld [vmem:[%s19 + $0x18] sm:$0xf]
  %v1624 = vld [vmem:[%s19 + $0x1c] sm:$0xf]
  %v1625 = vld [vmem:[%s20] sm:$0x1]
  %v1627 = vlaneseq
  %v1628 = vshrl.u32 %v1627, 7
  %v1629 = vsub.s32 0, %v1628
  %v1630 = vrot.slane %v1625, %v1629
  %v1640 = vunpack.c.l.b16 %v1617
  %v1641 = vunpack.c.l.b16 %v1618
  %v1642 = vunpack.c.l.b16 %v1619
  %v1643 = vunpack.c.l.b16 %v1620
  %v1644 = vunpack.c.l.b16 %v1621
  %v1645 = vunpack.c.l.b16 %v1622
  %v1646 = vunpack.c.l.b16 %v1623
  %v1647 = vunpack.c.l.b16 %v1624
  %v1648 = vpack.c.b16 %v1641, %v1640
  %v1649 = vpack.c.b16 %v1643, %v1642
  %v1650 = vpack.c.b16 %v1645, %v1644
  %v1651 = vpack.c.b16 %v1647, %v1646
  %v1657 = vsel %vm171, %v1611, 0
  %v1660 = vsel %vm171, %v1612, 0
  %v1663 = vsel %vm171, %v1613, 0
  %v1666 = vsel %vm171, %v1614, 0
  %v1669 = vsel %vm171, %v1615, 0
  %v1672 = vsel %vm171, %v1616, 0
  %1674 = vmatprep.subr.bf16.mxu0 0
  %1675 = vmatpush1.bf16.msra.mxu0 %v1648
  %1676 = vmatprep.subr.bf16.mxu0 0
  %1677 = vmatpush1.bf16.msra.mxu0 %v1649
  %1678 = vmatprep.subr.bf16.mxu0 0
  %1679 = vmatpush1.bf16.msra.mxu0 %v1650
  %1680 = vmatprep.subr.bf16.mxu0 0
  %1681 = vmatpush1.bf16.msra.mxu0 %v1651
  %1682 = vmatprep.subr.bf16.mxu0 0
  %1683 = vmatpush1.bf16.msra.mxu0 0
  %1684 = vmatprep.subr.bf16.mxu0 0
  %1685 = vmatpush1.bf16.msra.mxu0 0
  %1686 = vmatprep.subr.bf16.mxu0 0
  %1687 = vmatpush1.bf16.msra.mxu0 0
  %1688 = vmatprep.subr.bf16.mxu0 0
  %1689 = vmatpush1.bf16.msra.mxu0 0
  %1690 = vmatprep.subr.bf16.mxu0 0
  %1691 = vmatpush1.bf16.msra.mxu0 0
  %1692 = vmatprep.subr.bf16.mxu0 0
  %1693 = vmatpush1.bf16.msra.mxu0 0
  %1694 = vmatprep.subr.bf16.mxu0 0
  %1695 = vmatpush1.bf16.msra.mxu0 0
  %1696 = vmatprep.subr.bf16.mxu0 0
  %1697 = vmatpush1.bf16.msra.mxu0 0
  %1698 = vmatprep.subr.bf16.mxu0 0
  %1699 = vmatpush1.bf16.msra.mxu0 0
  %1700 = vmatprep.subr.bf16.mxu0 0
  %1701 = vmatpush1.bf16.msra.mxu0 0
  %1702 = vmatprep.subr.bf16.mxu0 0
  %1703 = vmatpush1.bf16.msra.mxu0 0
  %1704 = vmatprep.subr.bf16.mxu0 0
  %1705 = vmatpush1.bf16.msra.mxu0 0
  %1706 = vmatprep.mubr.bf16.mxu0 0
  %1707 = vmatmul.mubr.bf16.gmra.mrb[0].mxu0 %v1657
  %v1708 = vpop.f32.mrb[0].mxu0
  %v1709 = vadd.f32 %v1630, %v1708
  %v1710 = vpop.f32.mrb[0].mxu0
  %v1711 = vpop.f32.mrb[0].mxu0
  %v1712 = vadd.f32 %v1630, %v1711
  %v1713 = vpop.f32.mrb[0].mxu0
  %1714 = vmatprep.mubr.bf16.mxu0 0
  %1715 = vmatmul.mubr.bf16.gmra.mrb[0].mxu0 %v1660
  %v1716 = vpop.f32.mrb[0].mxu0
  %v1717 = vadd.f32 %v1630, %v1716
  %v1718 = vpop.f32.mrb[0].mxu0
  %v1719 = vpop.f32.mrb[0].mxu0
  %v1720 = vadd.f32 %v1630, %v1719
  %v1721 = vpop.f32.mrb[0].mxu0
  %1722 = vmatprep.mubr.bf16.mxu0 0
  %1723 = vmatmul.mubr.bf16.gmra.mrb[0].mxu0 %v1663
  %v1724 = vpop.f32.mrb[0].mxu0
  %v1725 = vadd.f32 %v1630, %v1724
  %v1726 = vpop.f32.mrb[0].mxu0
  %v1727 = vpop.f32.mrb[0].mxu0
  %v1728 = vadd.f32 %v1630, %v1727
  %v1729 = vpop.f32.mrb[0].mxu0
  %1730 = vmatprep.mubr.bf16.mxu0 0
  %1731 = vmatmul.mubr.bf16.gmra.mrb[0].mxu0 %v1666
  %v1732 = vpop.f32.mrb[0].mxu0
  %v1733 = vadd.f32 %v1630, %v1732
  %v1734 = vpop.f32.mrb[0].mxu0
  %v1735 = vpop.f32.mrb[0].mxu0
  %v1736 = vadd.f32 %v1630, %v1735
  %v1737 = vpop.f32.mrb[0].mxu0
  %1738 = vmatprep.mubr.bf16.mxu0 0
  %1739 = vmatmul.mubr.bf16.gmra.mrb[0].mxu0 %v1669
  %v1740 = vpop.f32.mrb[0].mxu0
  %v1741 = vadd.f32 %v1630, %v1740
  %v1742 = vpop.f32.mrb[0].mxu0
  %v1743 = vpop.f32.mrb[0].mxu0
  %v1744 = vadd.f32 %v1630, %v1743
  %v1745 = vpop.f32.mrb[0].mxu0
  %1746 = vmatprep.mubr.bf16.mxu0 0
  %1747 = vmatmul.mubr.bf16.gmra.mrb[0].mxu0 %v1672
  %v1748 = vpop.f32.mrb[0].mxu0
  %v1749 = vadd.f32 %v1630, %v1748
  %v1750 = vpop.f32.mrb[0].mxu0
  %v1751 = vpop.f32.mrb[0].mxu0
  %v1752 = vadd.f32 %v1630, %v1751
  %v1753 = vpop.f32.mrb[0].mxu0
  %1754 = vdwg.mxu0
  %vm1755 = vcmask 64512
  %1756 = vst.msk [vmem:[%s21] sm:$0xff] %vm1755, %v1709
  %1757 = vst.msk [vmem:[%s21 + $0x8] sm:$0xff] %vm1755, %v1712
  %1758 = vst.msk [vmem:[%s21 + $0x10] sm:$0xff] %vm1755, %v1717
  %1759 = vst.msk [vmem:[%s21 + $0x18] sm:$0xff] %vm1755, %v1720
  %1760 = vst.msk [vmem:[%s21 + $0x20] sm:$0xff] %vm1755, %v1725
  %1761 = vst.msk [vmem:[%s21 + $0x28] sm:$0xff] %vm1755, %v1728
  %1762 = vst.msk [vmem:[%s21 + $0x30] sm:$0xff] %vm1755, %v1733
  %1763 = vst.msk [vmem:[%s21 + $0x38] sm:$0xff] %vm1755, %v1736
  %1764 = vst.msk [vmem:[%s21 + $0x40] sm:$0xff] %vm1755, %v1741
  %1765 = vst.msk [vmem:[%s21 + $0x48] sm:$0xff] %vm1755, %v1744
  %1766 = vst.msk [vmem:[%s21 + $0x50] sm:$0xff] %vm1755, %v1749
  %1767 = vst.msk [vmem:[%s21 + $0x58] sm:$0xff] %vm1755, %v1752
  // Predicated region
  $region86: #{_lambda_.1} parent=0 // pred_check
    _
  $region87: #{_lambda_.1} parent=0 // pred_check_branch
    %1769 = sbr.rel (0) target = $region89
  $region88: #{_lambda_.1} parent=0 // pred_region
    _
  $region89: #{_lambda_.1} parent=0 // pred_fallthru
    _
  // Predicated region
  $region90: #{_lambda_.1} parent=0 // pred_check
    _
  $region91: #{_lambda_.1} parent=0 // pred_check_branch
    %1771 = sbr.rel (0) target = $region93
  $region92: #{_lambda_.1} parent=0 // pred_region
    _
  $region93: #{_lambda_.1} parent=0 // pred_fallthru
    _

</llo_original>
